<compile_context>
chip_gen: v6e
topology: v6e:2x2x1
jax: 0.10.0
libtpu: 0.0.40
codegen_flags: <defaults>
</compile_context>

<pallas_src>
import functools

import jax
import jax.numpy as jnp
from jax.experimental import pallas as pl
from jax.experimental.pallas import tpu as pltpu


# ----------------------------- Pallas kernel ---------------------------------

def causal_attention_kernel(x_ref, nw_ref, nb_ref, qw_ref, kw_ref, vw_ref,
                            ow_ref, o_ref, *, heads, dim_head):
    bb, n, d = x_ref.shape          # (batch_block, seq, dim)
    m = bb * n                      # batches folded into matmul rows
    g = heads * bb                  # batched-attention "groups"
    scale = jnp.float32(dim_head) ** -0.5

    # ---- LayerNorm (f32), batches folded into rows -----------------------
    x = x_ref[...].astype(jnp.float32).reshape(m, d)
    mu = jnp.mean(x, axis=-1, keepdims=True)
    var = jnp.mean((x - mu) ** 2, axis=-1, keepdims=True)
    xn = (x - mu) * jax.lax.rsqrt(var + 1e-5) * nw_ref[...] + nb_ref[...]

    # ---- QKV projections: one heads-batched matmul each (bf16 in, f32 acc) --
    xn_b = jnp.broadcast_to(xn.astype(jnp.bfloat16), (heads, m, d))
    q = jnp.einsum("hmd,hde->hme", xn_b, qw_ref[...],
                   preferred_element_type=jnp.float32)
    k = jnp.einsum("hmd,hde->hme", xn_b, kw_ref[...],
                   preferred_element_type=jnp.float32)
    v = jnp.einsum("hmd,hde->hme", xn_b, vw_ref[...],
                   preferred_element_type=jnp.float32)
    # (heads, bb*n, Dh) -> (heads*bb, n, Dh): pure leading-dim regroup (free).
    q = q.astype(jnp.bfloat16).reshape(g, n, dim_head)
    k = k.astype(jnp.bfloat16).reshape(g, n, dim_head)
    v = v.astype(jnp.bfloat16).reshape(g, n, dim_head)

    # ---- causal attention, batched over (heads * batch_block) ------------
    s = jnp.einsum("gqd,gkd->gqk", q, k,
                   preferred_element_type=jnp.float32) * scale
    row = jax.lax.broadcasted_iota(jnp.int32, (n, n), 0)
    col = jax.lax.broadcasted_iota(jnp.int32, (n, n), 1)
    s = jnp.where((col <= row)[None], s, jnp.float32(-1e30))
    s_max = jnp.max(s, axis=-1, keepdims=True)
    e = jnp.exp(s - s_max)
    p = e * pl.reciprocal(jnp.sum(e, axis=-1, keepdims=True), approx=True)
    # attn dropout has p=0.0 -> identity (eval semantics)
    ctx = jnp.einsum("gqk,gkd->gqd", p.astype(jnp.bfloat16), v,
                     preferred_element_type=jnp.float32)        # (g, n, Dh)

    # ---- output projection: accumulate per-head slabs (no lane-dim concat) --
    ctx = ctx.astype(jnp.bfloat16).reshape(heads, m, dim_head)
    y = jnp.zeros((m, d), jnp.float32)
    for h in range(heads):          # heads is static -> unrolled
        y = y + jnp.dot(ctx[h], ow_ref[h], preferred_element_type=jnp.float32)

    o_ref[...] = y.reshape(bb, n, d).astype(o_ref.dtype)


# ----------------------------- wrapper ----------------------------------------

def causal_attention_forward(x, params, *, heads, dim_head, batch_block=None):
    B, N, D = x.shape
    inner = heads * dim_head
    bb = B if batch_block is None else batch_block
    assert B % bb == 0, "batch must be divisible by batch_block"

    # LayerNorm params as (1, D) rows.
    nw = params["norm_w"].reshape(1, D).astype(jnp.float32)
    nb = params["norm_b"].reshape(1, D).astype(jnp.float32)

    # Pre-split per-head weight slabs (done once, outside the kernel), bf16.
    qkv_w = params["qkv_w"]                               # (D, 3*inner), y = x @ W
    qw = jnp.transpose(qkv_w[:, 0 * inner:1 * inner].reshape(D, heads, dim_head),
                       (1, 0, 2)).astype(jnp.bfloat16)    # (heads, D, Dh)
    kw = jnp.transpose(qkv_w[:, 1 * inner:2 * inner].reshape(D, heads, dim_head),
                       (1, 0, 2)).astype(jnp.bfloat16)
    vw = jnp.transpose(qkv_w[:, 2 * inner:3 * inner].reshape(D, heads, dim_head),
                       (1, 0, 2)).astype(jnp.bfloat16)
    ow = params["out_w"].reshape(heads, dim_head, D).astype(jnp.bfloat16)

    weights = [nw, nb, qw, kw, vw, ow]

    def const_spec(a):              # grid-invariant (fully resident) weights
        nd = a.ndim
        return pl.BlockSpec(a.shape, lambda i, _nd=nd: (0,) * _nd)

    kernel = functools.partial(causal_attention_kernel,
                               heads=heads, dim_head=dim_head)

    return pl.pallas_call(
        kernel,
        out_shape=jax.ShapeDtypeStruct((B, N, D), jnp.float32),
        grid=(B // bb,),
        in_specs=[pl.BlockSpec((bb, N, D), lambda i: (i, 0, 0))]
                 + [const_spec(w) for w in weights],
        out_specs=pl.BlockSpec((bb, N, D), lambda i: (i, 0, 0)),
        compiler_params=pltpu.CompilerParams(
            dimension_semantics=("parallel",)),      # independent batch blocks
    )(x, *weights)


# ----------------------------- pure-JAX reference (f32, torch semantics) ------

def causal_attention_reference(x, params, *, heads, dim_head):
    B, N, D = x.shape
    inner = heads * dim_head
    scale = dim_head ** -0.5
    mu = jnp.mean(x, -1, keepdims=True)
    var = jnp.mean((x - mu) ** 2, -1, keepdims=True)
    xn = (x - mu) / jnp.sqrt(var + 1e-5) * params["norm_w"] + params["norm_b"]
    qkv = xn @ params["qkv_w"]
    q, k, v = jnp.split(qkv, 3, axis=-1)

    def split_heads(t):
        return t.reshape(B, N, heads, dim_head).transpose(0, 2, 1, 3)

    q, k, v = map(split_heads, (q, k, v))
    s = jnp.einsum("bhqd,bhkd->bhqk", q, k) * scale
    causal = jnp.tril(jnp.ones((N, N), dtype=bool))
    s = jnp.where(causal[None, None], s, -1e30)
    p = jax.nn.softmax(s, axis=-1)
    o = jnp.einsum("bhqk,bhkd->bhqd", p, v)
    o = o.transpose(0, 2, 1, 3).reshape(B, N, inner)
    return o @ params["out_w"]


# ----------------------------- parameter init ----------------------------------

def init_params(key, *, dim, heads, dim_head):
    inner = heads * dim_head
    k1, k2, k3, k4 = jax.random.split(key, 4)
    return {
        "norm_w": 1.0 + 0.1 * jax.random.normal(k3, (dim,), jnp.float32),
        "norm_b": 0.1 * jax.random.normal(k4, (dim,), jnp.float32),
        # stored transposed w.r.t. torch.nn.Linear: y = x @ W
        "qkv_w": 0.05 * jax.random.normal(k1, (dim, 3 * inner), jnp.float32),
        "out_w": 0.05 * jax.random.normal(k2, (inner, dim), jnp.float32),
    }


# ----------------------------- main ---------------------------------------------

if __name__ == "__main__":
    B, N, D = 4, 8, 64            # batch, seq len, model dim (small)
    heads, dim_head = 4, 32       # module defaults -> inner_dim = 128
    # dropout = 0.0 -> identity (eval semantics)
    # TODO(synk): stochastic dropout (p > 0, training mode) is not modeled.

    key = jax.random.PRNGKey(0)
    kx, kp = jax.random.split(key)
    x = jax.random.normal(kx, (B, N, D), jnp.float32)
    params = init_params(kp, dim=D, heads=heads, dim_head=dim_head)

    out = causal_attention_forward(x, params, heads=heads, dim_head=dim_head,
                                   batch_block=2)   # grid=(2,), parallel over TCs
    out = jax.block_until_ready(out)
    assert out.shape == (B, N, D)

    ref = causal_attention_reference(x, params, heads=heads, dim_head=dim_head)
    max_err = float(jnp.max(jnp.abs(out - ref)))
    # bf16 matmul inputs (f32 accumulation) -> slightly loosened tolerance
    assert jnp.allclose(out, ref, rtol=2e-2, atol=2e-2), max_err

    print("KERNEL_OK")
</pallas_src>

<mosaic_0001>
module attributes {stable_mosaic.version = 11 : i64} {
  func.func @causal_attention_kernel(%arg0: i32, %arg1: memref<2x8x64xf32, #tpu.memory_space<vmem>>, %arg2: memref<1x64xf32, #tpu.memory_space<vmem>>, %arg3: memref<1x64xf32, #tpu.memory_space<vmem>>, %arg4: memref<4x64x32xbf16, #tpu.memory_space<vmem>>, %arg5: memref<4x64x32xbf16, #tpu.memory_space<vmem>>, %arg6: memref<4x64x32xbf16, #tpu.memory_space<vmem>>, %arg7: memref<4x32x64xbf16, #tpu.memory_space<vmem>>, %arg8: memref<2x8x64xf32, #tpu.memory_space<vmem>>) attributes {dimension_semantics = [#tpu.dimension_semantics<parallel>], iteration_bounds = array<i64: 2>, scalar_prefetch = 0 : i64, scratch_operands = 0 : i64, tpu.core_type = #tpu.core_type<tc>, window_params = [{transform_indices = @transform_0, window_bounds = array<i64: 2, 8, 64>}, {pipeline_mode = #tpu.pipeline_mode<synchronous>, transform_indices = @transform_1, window_bounds = array<i64: 1, 64>}, {pipeline_mode = #tpu.pipeline_mode<synchronous>, transform_indices = @transform_2, window_bounds = array<i64: 1, 64>}, {pipeline_mode = #tpu.pipeline_mode<synchronous>, transform_indices = @transform_3, window_bounds = array<i64: 4, 64, 32>}, {pipeline_mode = #tpu.pipeline_mode<synchronous>, transform_indices = @transform_4, window_bounds = array<i64: 4, 64, 32>}, {pipeline_mode = #tpu.pipeline_mode<synchronous>, transform_indices = @transform_5, window_bounds = array<i64: 4, 64, 32>}, {pipeline_mode = #tpu.pipeline_mode<synchronous>, transform_indices = @transform_6, window_bounds = array<i64: 4, 32, 64>}, {transform_indices = @transform_7, window_bounds = array<i64: 2, 8, 64>}]} {
    %cst = arith.constant 3.200000e+01 : f32
    %cst_0 = arith.constant -5.000000e-01 : f32
    %0 = math.powf %cst, %cst_0 : f32
    %c0 = arith.constant 0 : index
    %c0_1 = arith.constant 0 : index
    %c0_2 = arith.constant 0 : index
    %1 = vector.load %arg1[%c0, %c0_1, %c0_2] : memref<2x8x64xf32, #tpu.memory_space<vmem>>, vector<2x8x64xf32>
    %2 = vector.shape_cast %1 : vector<2x8x64xf32> to vector<16x64xf32>
    %cst_3 = arith.constant dense<0.000000e+00> : vector<16xf32>
    %3 = vector.multi_reduction <add>, %2, %cst_3 [1] : vector<16x64xf32> to vector<16xf32>
    %4 = vector.shape_cast %3 : vector<16xf32> to vector<16x1xf32>
    %cst_4 = arith.constant 6.400000e+01 : f32
    %5 = vector.broadcast %cst_4 : f32 to vector<16x1xf32>
    %6 = arith.divf %4, %5 : vector<16x1xf32>
    %7 = vector.broadcast %6 : vector<16x1xf32> to vector<16x64xf32>
    %8 = arith.subf %2, %7 : vector<16x64xf32>
    %9 = arith.mulf %8, %8 : vector<16x64xf32>
    %cst_5 = arith.constant dense<0.000000e+00> : vector<16xf32>
    %10 = vector.multi_reduction <add>, %9, %cst_5 [1] : vector<16x64xf32> to vector<16xf32>
    %11 = vector.shape_cast %10 : vector<16xf32> to vector<16x1xf32>
    %cst_6 = arith.constant 6.400000e+01 : f32
    %12 = vector.broadcast %cst_6 : f32 to vector<16x1xf32>
    %13 = arith.divf %11, %12 : vector<16x1xf32>
    %14 = vector.broadcast %6 : vector<16x1xf32> to vector<16x64xf32>
    %15 = arith.subf %2, %14 : vector<16x64xf32>
    %cst_7 = arith.constant 9.99999974E-6 : f32
    %16 = vector.broadcast %cst_7 : f32 to vector<16x1xf32>
    %17 = arith.addf %13, %16 : vector<16x1xf32>
    %18 = math.rsqrt %17 : vector<16x1xf32>
    %19 = vector.broadcast %18 : vector<16x1xf32> to vector<16x64xf32>
    %20 = arith.mulf %15, %19 : vector<16x64xf32>
    %c0_8 = arith.constant 0 : index
    %c0_9 = arith.constant 0 : index
    %21 = vector.load %arg2[%c0_8, %c0_9] : memref<1x64xf32, #tpu.memory_space<vmem>>, vector<1x64xf32>
    %22 = vector.broadcast %21 : vector<1x64xf32> to vector<16x64xf32>
    %23 = arith.mulf %20, %22 : vector<16x64xf32>
    %c0_10 = arith.constant 0 : index
    %c0_11 = arith.constant 0 : index
    %24 = vector.load %arg3[%c0_10, %c0_11] : memref<1x64xf32, #tpu.memory_space<vmem>>, vector<1x64xf32>
    %25 = vector.broadcast %24 : vector<1x64xf32> to vector<16x64xf32>
    %26 = arith.addf %23, %25 : vector<16x64xf32>
    %27 = arith.truncf %26 : vector<16x64xf32> to vector<16x64xbf16>
    %28 = vector.shape_cast %27 : vector<16x64xbf16> to vector<1x16x64xbf16>
    %29 = vector.broadcast %28 : vector<1x16x64xbf16> to vector<4x16x64xbf16>
    %c0_12 = arith.constant 0 : index
    %c0_13 = arith.constant 0 : index
    %c0_14 = arith.constant 0 : index
    %30 = vector.load %arg4[%c0_12, %c0_13, %c0_14] : memref<4x64x32xbf16, #tpu.memory_space<vmem>>, vector<4x64x32xbf16>
    "tpu.trace_start"() <{level = 10 : i32, message = "hmd,hde->hme"}> : () -> ()
    %cst_15 = arith.constant dense<0.000000e+00> : vector<4x16x32xf32>
    %31 = tpu.matmul %29, %30, %cst_15 {dimension_numbers = #tpu.dot_dimension_numbers<[2], [1], [1], [2], [0, 0, 0, 1, 1, 2], [0], [0]>} : vector<4x16x64xbf16>, vector<4x64x32xbf16>, vector<4x16x32xf32> -> vector<4x16x32xf32>
    "tpu.trace_stop"() : () -> ()
    %c0_16 = arith.constant 0 : index
    %c0_17 = arith.constant 0 : index
    %c0_18 = arith.constant 0 : index
    %32 = vector.load %arg5[%c0_16, %c0_17, %c0_18] : memref<4x64x32xbf16, #tpu.memory_space<vmem>>, vector<4x64x32xbf16>
    "tpu.trace_start"() <{level = 10 : i32, message = "hmd,hde->hme"}> : () -> ()
    %cst_19 = arith.constant dense<0.000000e+00> : vector<4x16x32xf32>
    %33 = tpu.matmul %29, %32, %cst_19 {dimension_numbers = #tpu.dot_dimension_numbers<[2], [1], [1], [2], [0, 0, 0, 1, 1, 2], [0], [0]>} : vector<4x16x64xbf16>, vector<4x64x32xbf16>, vector<4x16x32xf32> -> vector<4x16x32xf32>
    "tpu.trace_stop"() : () -> ()
    %c0_20 = arith.constant 0 : index
    %c0_21 = arith.constant 0 : index
    %c0_22 = arith.constant 0 : index
    %34 = vector.load %arg6[%c0_20, %c0_21, %c0_22] : memref<4x64x32xbf16, #tpu.memory_space<vmem>>, vector<4x64x32xbf16>
    "tpu.trace_start"() <{level = 10 : i32, message = "hmd,hde->hme"}> : () -> ()
    %cst_23 = arith.constant dense<0.000000e+00> : vector<4x16x32xf32>
    %35 = tpu.matmul %29, %34, %cst_23 {dimension_numbers = #tpu.dot_dimension_numbers<[2], [1], [1], [2], [0, 0, 0, 1, 1, 2], [0], [0]>} : vector<4x16x64xbf16>, vector<4x64x32xbf16>, vector<4x16x32xf32> -> vector<4x16x32xf32>
    "tpu.trace_stop"() : () -> ()
    %36 = arith.truncf %31 : vector<4x16x32xf32> to vector<4x16x32xbf16>
    %37 = vector.shape_cast %36 : vector<4x16x32xbf16> to vector<8x8x32xbf16>
    %38 = arith.truncf %33 : vector<4x16x32xf32> to vector<4x16x32xbf16>
    %39 = vector.shape_cast %38 : vector<4x16x32xbf16> to vector<8x8x32xbf16>
    %40 = arith.truncf %35 : vector<4x16x32xf32> to vector<4x16x32xbf16>
    %41 = vector.shape_cast %40 : vector<4x16x32xbf16> to vector<8x8x32xbf16>
    "tpu.trace_start"() <{level = 10 : i32, message = "gqd,gkd->gqk"}> : () -> ()
    %cst_24 = arith.constant dense<0.000000e+00> : vector<8x8x8xf32>
    %42 = tpu.matmul %37, %39, %cst_24 {dimension_numbers = #tpu.dot_dimension_numbers<[2], [2], [1], [1], [0, 0, 0, 1, 1, 1], [0], [0]>} : vector<8x8x32xbf16>, vector<8x8x32xbf16>, vector<8x8x8xf32> -> vector<8x8x8xf32>
    "tpu.trace_stop"() : () -> ()
    %43 = vector.broadcast %0 : f32 to vector<8x8x8xf32>
    %44 = arith.mulf %42, %43 : vector<8x8x8xf32>
    %45 = tpu.iota {dimensions = array<i32: 0>} : vector<8x8xi32>
    %46 = tpu.iota {dimensions = array<i32: 1>} : vector<8x8xi32>
    %47 = arith.cmpi sle, %46, %45 : vector<8x8xi32>
    %48 = vector.shape_cast %47 : vector<8x8xi1> to vector<1x8x8xi1>
    %cst_25 = arith.constant -1.000000e+30 : f32
    %49 = vector.shape_cast %48 : vector<1x8x8xi1> to vector<1x8x8xi1>
    %50 = vector.broadcast %49 : vector<1x8x8xi1> to vector<8x8x8xi1>
    %51 = vector.broadcast %cst_25 : f32 to vector<8x8x8xf32>
    %52 = arith.select %50, %44, %51 : vector<8x8x8xi1>, vector<8x8x8xf32>
    %cst_26 = arith.constant dense<0xFF800000> : vector<8x8xf32>
    %53 = vector.multi_reduction <maximumf>, %52, %cst_26 [2] : vector<8x8x8xf32> to vector<8x8xf32>
    %54 = vector.shape_cast %53 : vector<8x8xf32> to vector<8x8x1xf32>
    %55 = vector.broadcast %54 : vector<8x8x1xf32> to vector<8x8x8xf32>
    %56 = arith.subf %52, %55 : vector<8x8x8xf32>
    %57 = math.exp %56 : vector<8x8x8xf32>
    %cst_27 = arith.constant dense<0.000000e+00> : vector<8x8xf32>
    %58 = vector.multi_reduction <add>, %57, %cst_27 [2] : vector<8x8x8xf32> to vector<8x8xf32>
    %59 = vector.shape_cast %58 : vector<8x8xf32> to vector<8x8x1xf32>
    %60 = tpu.reciprocal %59 {approx = true} : vector<8x8x1xf32> -> vector<8x8x1xf32>
    %61 = vector.broadcast %60 : vector<8x8x1xf32> to vector<8x8x8xf32>
    %62 = arith.mulf %57, %61 : vector<8x8x8xf32>
    %63 = arith.truncf %62 : vector<8x8x8xf32> to vector<8x8x8xbf16>
    "tpu.trace_start"() <{level = 10 : i32, message = "gqk,gkd->gqd"}> : () -> ()
    %cst_28 = arith.constant dense<0.000000e+00> : vector<8x8x32xf32>
    %64 = tpu.matmul %63, %41, %cst_28 {dimension_numbers = #tpu.dot_dimension_numbers<[2], [1], [1], [2], [0, 0, 0, 1, 1, 2], [0], [0]>} : vector<8x8x8xbf16>, vector<8x8x32xbf16>, vector<8x8x32xf32> -> vector<8x8x32xf32>
    "tpu.trace_stop"() : () -> ()
    %65 = arith.truncf %64 : vector<8x8x32xf32> to vector<8x8x32xbf16>
    %66 = vector.shape_cast %65 : vector<8x8x32xbf16> to vector<4x16x32xbf16>
    %cst_29 = arith.constant 0.000000e+00 : f32
    %67 = vector.broadcast %cst_29 : f32 to vector<16x64xf32>
    %68 = vector.extract_strided_slice %66 {offsets = [0, 0, 0], sizes = [1, 16, 32], strides = [1, 1, 1]} : vector<4x16x32xbf16> to vector<1x16x32xbf16>
    %69 = vector.shape_cast %68 : vector<1x16x32xbf16> to vector<16x32xbf16>
    %c0_30 = arith.constant 0 : index
    %c0_31 = arith.constant 0 : index
    %c0_32 = arith.constant 0 : index
    %70 = vector.load %arg7[%c0_30, %c0_31, %c0_32] : memref<4x32x64xbf16, #tpu.memory_space<vmem>>, vector<1x32x64xbf16>
    %71 = vector.shape_cast %70 : vector<1x32x64xbf16> to vector<32x64xbf16>
    %cst_33 = arith.constant dense<0.000000e+00> : vector<16x64xf32>
    %72 = tpu.matmul %69, %71, %cst_33 {dimension_numbers = #tpu.dot_dimension_numbers<[1], [0], [0], [1], [0, 0, 1, 1], [], []>} : vector<16x32xbf16>, vector<32x64xbf16>, vector<16x64xf32> -> vector<16x64xf32>
    %73 = arith.addf %67, %72 : vector<16x64xf32>
    %74 = vector.extract_strided_slice %66 {offsets = [1, 0, 0], sizes = [1, 16, 32], strides = [1, 1, 1]} : vector<4x16x32xbf16> to vector<1x16x32xbf16>
    %75 = vector.shape_cast %74 : vector<1x16x32xbf16> to vector<16x32xbf16>
    %c1 = arith.constant 1 : index
    %c0_34 = arith.constant 0 : index
    %c0_35 = arith.constant 0 : index
    %76 = vector.load %arg7[%c1, %c0_34, %c0_35] : memref<4x32x64xbf16, #tpu.memory_space<vmem>>, vector<1x32x64xbf16>
    %77 = vector.shape_cast %76 : vector<1x32x64xbf16> to vector<32x64xbf16>
    %cst_36 = arith.constant dense<0.000000e+00> : vector<16x64xf32>
    %78 = tpu.matmul %75, %77, %cst_36 {dimension_numbers = #tpu.dot_dimension_numbers<[1], [0], [0], [1], [0, 0, 1, 1], [], []>} : vector<16x32xbf16>, vector<32x64xbf16>, vector<16x64xf32> -> vector<16x64xf32>
    %79 = arith.addf %73, %78 : vector<16x64xf32>
    %80 = vector.extract_strided_slice %66 {offsets = [2, 0, 0], sizes = [1, 16, 32], strides = [1, 1, 1]} : vector<4x16x32xbf16> to vector<1x16x32xbf16>
    %81 = vector.shape_cast %80 : vector<1x16x32xbf16> to vector<16x32xbf16>
    %c2 = arith.constant 2 : index
    %c0_37 = arith.constant 0 : index
    %c0_38 = arith.constant 0 : index
    %82 = vector.load %arg7[%c2, %c0_37, %c0_38] : memref<4x32x64xbf16, #tpu.memory_space<vmem>>, vector<1x32x64xbf16>
    %83 = vector.shape_cast %82 : vector<1x32x64xbf16> to vector<32x64xbf16>
    %cst_39 = arith.constant dense<0.000000e+00> : vector<16x64xf32>
    %84 = tpu.matmul %81, %83, %cst_39 {dimension_numbers = #tpu.dot_dimension_numbers<[1], [0], [0], [1], [0, 0, 1, 1], [], []>} : vector<16x32xbf16>, vector<32x64xbf16>, vector<16x64xf32> -> vector<16x64xf32>
    %85 = arith.addf %79, %84 : vector<16x64xf32>
    %86 = vector.extract_strided_slice %66 {offsets = [3, 0, 0], sizes = [1, 16, 32], strides = [1, 1, 1]} : vector<4x16x32xbf16> to vector<1x16x32xbf16>
    %87 = vector.shape_cast %86 : vector<1x16x32xbf16> to vector<16x32xbf16>
    %c3 = arith.constant 3 : index
    %c0_40 = arith.constant 0 : index
    %c0_41 = arith.constant 0 : index
    %88 = vector.load %arg7[%c3, %c0_40, %c0_41] : memref<4x32x64xbf16, #tpu.memory_space<vmem>>, vector<1x32x64xbf16>
    %89 = vector.shape_cast %88 : vector<1x32x64xbf16> to vector<32x64xbf16>
    %cst_42 = arith.constant dense<0.000000e+00> : vector<16x64xf32>
    %90 = tpu.matmul %87, %89, %cst_42 {dimension_numbers = #tpu.dot_dimension_numbers<[1], [0], [0], [1], [0, 0, 1, 1], [], []>} : vector<16x32xbf16>, vector<32x64xbf16>, vector<16x64xf32> -> vector<16x64xf32>
    %91 = arith.addf %85, %90 : vector<16x64xf32>
    %92 = vector.shape_cast %91 : vector<16x64xf32> to vector<2x8x64xf32>
    %c0_43 = arith.constant 0 : index
    %c0_44 = arith.constant 0 : index
    %c0_45 = arith.constant 0 : index
    %93 = vector.load %arg8[%c0_43, %c0_44, %c0_45] : memref<2x8x64xf32, #tpu.memory_space<vmem>>, vector<2x8x64xf32>
    tpu.vector_store %arg8[%c0_43, %c0_44, %c0_45], %92 {strides = array<i32>} : memref<2x8x64xf32, #tpu.memory_space<vmem>>, vector<2x8x64xf32>,
    return
  }
  func.func @transform_0(%arg0: i32) -> (i32, i32, i32) {
    %c0_i32 = arith.constant 0 : i32
    %c0_i32_0 = arith.constant 0 : i32
    %c0_i32_1 = arith.constant 0 : i32
    return %arg0, %c0_i32, %c0_i32_0 : i32, i32, i32
  }
  func.func @transform_1(%arg0: i32) -> (i32, i32) {
    %c0_i32 = arith.constant 0 : i32
    %c0_i32_0 = arith.constant 0 : i32
    %c0_i32_1 = arith.constant 0 : i32
    return %c0_i32, %c0_i32_0 : i32, i32
  }
  func.func @transform_2(%arg0: i32) -> (i32, i32) {
    %c0_i32 = arith.constant 0 : i32
    %c0_i32_0 = arith.constant 0 : i32
    %c0_i32_1 = arith.constant 0 : i32
    return %c0_i32, %c0_i32_0 : i32, i32
  }
  func.func @transform_3(%arg0: i32) -> (i32, i32, i32) {
    %c0_i32 = arith.constant 0 : i32
    %c0_i32_0 = arith.constant 0 : i32
    %c0_i32_1 = arith.constant 0 : i32
    %c0_i32_2 = arith.constant 0 : i32
    return %c0_i32, %c0_i32_0, %c0_i32_1 : i32, i32, i32
  }
  func.func @transform_4(%arg0: i32) -> (i32, i32, i32) {
    %c0_i32 = arith.constant 0 : i32
    %c0_i32_0 = arith.constant 0 : i32
    %c0_i32_1 = arith.constant 0 : i32
    %c0_i32_2 = arith.constant 0 : i32
    return %c0_i32, %c0_i32_0, %c0_i32_1 : i32, i32, i32
  }
  func.func @transform_5(%arg0: i32) -> (i32, i32, i32) {
    %c0_i32 = arith.constant 0 : i32
    %c0_i32_0 = arith.constant 0 : i32
    %c0_i32_1 = arith.constant 0 : i32
    %c0_i32_2 = arith.constant 0 : i32
    return %c0_i32, %c0_i32_0, %c0_i32_1 : i32, i32, i32
  }
  func.func @transform_6(%arg0: i32) -> (i32, i32, i32) {
    %c0_i32 = arith.constant 0 : i32
    %c0_i32_0 = arith.constant 0 : i32
    %c0_i32_1 = arith.constant 0 : i32
    %c0_i32_2 = arith.constant 0 : i32
    return %c0_i32, %c0_i32_0, %c0_i32_1 : i32, i32, i32
  }
  func.func @transform_7(%arg0: i32) -> (i32, i32, i32) {
    %c0_i32 = arith.constant 0 : i32
    %c0_i32_0 = arith.constant 0 : i32
    %c0_i32_1 = arith.constant 0 : i32
    return %arg0, %c0_i32, %c0_i32_0 : i32, i32, i32
  }
}

</mosaic_0001>

<llo_original>
// kernel: tpu_custom_call.1
$region0: #{tpu_custom_call.1}
  #allocation0 [shape = 'u32[]', space=smem, size = 0x4, offset = 0x4, fixed_abs, tag = 'smem constant byte address 0x4 - core index']
  #allocation1 [shape = 'u32[144,128]{1,0:T(1,128)}', space=vmem, size = 0x12000, scoped, tag = 'internal scratch']
  %s0 = inlined_call_operand.vmem [shape: f32[4,8,64], index: 0, kind: input, shape index: {}]
  %s1 = inlined_call_operand.vmem [shape: f32[1,64], index: 1, kind: input, shape index: {}]
  %s2 = inlined_call_operand.vmem [shape: f32[1,64], index: 2, kind: input, shape index: {}]
  %s3 = inlined_call_operand.vmem [shape: bf16[4,64,32], index: 3, kind: input, shape index: {}]
  %s4 = inlined_call_operand.vmem [shape: bf16[4,64,32], index: 4, kind: input, shape index: {}]
  %s5 = inlined_call_operand.vmem [shape: bf16[4,64,32], index: 5, kind: input, shape index: {}]
  %s6 = inlined_call_operand.vmem [shape: bf16[4,32,64], index: 6, kind: input, shape index: {}]
  %s7 = inlined_call_operand.hbm [shape: f32[4,8,64], index: 7, kind: output, shape index: {}]
  %s8 = sld [smem:[#allocation0]]
  $region61: #{tpu_custom_call.1} parent=0
    _
  %s10 = ssub.s32 1, %s8
  %s11 = scalar_select 0, %s10, %s8
  $region1: #{tpu_custom_call.1} parent=0
    #allocation2 [shape = 'u8[16384]{0}', space=vmem, size = 0x4000, scoped, tag = 'output window, operand 0']
    #allocation3 [shape = 's32[2]{0}', space=sflag, size = 0x8, scoped, tag = 'scoped memory for tpu_custom_call.1']
    %12 = vsyncpa [#allocation3], 0
    %s13 = scalar_lea.sflag [#allocation3], 1
    %14 = vsyncpa %s13, 0
    loop: start=0, step=1, limit=4
    $region2: #{tpu_custom_call.1} parent=1 // loop_pre_header
      _
    $region3: #{tpu_custom_call.1} parent=1 // loop_header
      %s16 = sphi 0, %s20
      %p17 = scmp.ge.s32.totalorder %s16, 4
      %s26 = sphi 0, %s28
      %s29 = sphi 0, %s26
      %s30 = sphi 0, %s29
      %s46 = sphi 0, %s30
      %s50 = sphi 0, %s50
      %s52 = sphi 0, %s50
      %s53 = sphi 0, %s52
      %s67 = sphi 0, %s53
      %s71 = sphi 0, %s71
      %s73 = sphi 0, %s71
      %s74 = sphi 0, %s73
      %s88 = sphi 0, %s74
      %s92 = sphi 0, %s92
      %s94 = sphi 0, %s92
      %s95 = sphi 0, %s94
      %s109 = sphi 0, %s95
      %s113 = sphi 0, %s113
      %s115 = sphi 0, %s113
      %s116 = sphi 0, %s115
      %s130 = sphi 0, %s116
      %s134 = sphi 0, %s134
      %s136 = sphi 0, %s134
      %s137 = sphi 0, %s136
      %s151 = sphi 0, %s137
      %s155 = sphi 0, %s155
      %s157 = sphi 0, %s155
      %s158 = sphi 0, %s157
      %s172 = sphi 0, %s158
      %s178 = sphi 0, %s180
      %s181 = sphi 0, %s178
      %s182 = sphi 0, %s181
      %s198 = sphi 0, %s182
    $region4: #{tpu_custom_call.1} parent=1 // loop_header_branch
      %19 = sbr.rel (%p17) target = $region8
    $region5: #{tpu_custom_call.1} parent=1 // loop_body
      %s21 = ssub.s32 %s16, 1
      %s22 = ssub.s32 %s16, 2
      %s23 = sadd.s32 %s16, 1
      %s24 = ssub.s32 %s16, %s23
      %p25 = scmp.eq.s32.totalorder %s24, 0
      %s27 = sadd.s32 %s26, 1
      %s28 = scalar_select %p25, %s26, %s27
      %p31 = pneg %p25
      %p32 = scmp.eq.s32.totalorder %s16, 1
      %p33 = por %p31, %p32
      %p34 = scmp.ne.s32.totalorder %s26, %s29
      %p35 = scmp.eq.s32.totalorder %s16, 0
      %p36 = por %p34, %p35
      %p37 = scmp.ne.s32.totalorder %s26, %s29
      %p38 = scmp.eq.s32.totalorder %s21, 1
      %p39 = por %p37, %p38
      %p40 = scmp.ne.s32.totalorder %s29, %s30
      %p41 = scmp.eq.s32.totalorder %s21, 0
      %p42 = por %p40, %p41
      %p43 = scmp.ne.s32.totalorder %s29, %s30
      %p44 = scmp.eq.s32.totalorder %s22, 1
      %p45 = por %p43, %p44
      %p47 = scmp.ne.s32.totalorder %s30, %s46
      %p48 = scmp.eq.s32.totalorder %s22, 0
      %p49 = por %p47, %p48
      %s51 = sadd.s32 %s50, 1
      %p54 = scmp.eq.s32.totalorder %s16, 1
      %p55 = scmp.ne.s32.totalorder %s50, %s52
      %p56 = scmp.eq.s32.totalorder %s16, 0
      %p57 = por %p55, %p56
      %p58 = scmp.ne.s32.totalorder %s50, %s52
      %p59 = scmp.eq.s32.totalorder %s21, 1
      %p60 = por %p58, %p59
      %p61 = scmp.ne.s32.totalorder %s52, %s53
      %p62 = scmp.eq.s32.totalorder %s21, 0
      %p63 = por %p61, %p62
      %p64 = scmp.ne.s32.totalorder %s52, %s53
      %p65 = scmp.eq.s32.totalorder %s22, 1
      %p66 = por %p64, %p65
      %p68 = scmp.ne.s32.totalorder %s53, %s67
      %p69 = scmp.eq.s32.totalorder %s22, 0
      %p70 = por %p68, %p69
      %s72 = sadd.s32 %s71, 1
      %p75 = scmp.eq.s32.totalorder %s16, 1
      %p76 = scmp.ne.s32.totalorder %s71, %s73
      %p77 = scmp.eq.s32.totalorder %s16, 0
      %p78 = por %p76, %p77
      %p79 = scmp.ne.s32.totalorder %s71, %s73
      %p80 = scmp.eq.s32.totalorder %s21, 1
      %p81 = por %p79, %p80
      %p82 = scmp.ne.s32.totalorder %s73, %s74
      %p83 = scmp.eq.s32.totalorder %s21, 0
      %p84 = por %p82, %p83
      %p85 = scmp.ne.s32.totalorder %s73, %s74
      %p86 = scmp.eq.s32.totalorder %s22, 1
      %p87 = por %p85, %p86
      %p89 = scmp.ne.s32.totalorder %s74, %s88
      %p90 = scmp.eq.s32.totalorder %s22, 0
      %p91 = por %p89, %p90
      %s93 = sadd.s32 %s92, 1
      %p96 = scmp.eq.s32.totalorder %s16, 1
      %p97 = scmp.ne.s32.totalorder %s92, %s94
      %p98 = scmp.eq.s32.totalorder %s16, 0
      %p99 = por %p97, %p98
      %p100 = scmp.ne.s32.totalorder %s92, %s94
      %p101 = scmp.eq.s32.totalorder %s21, 1
      %p102 = por %p100, %p101
      %p103 = scmp.ne.s32.totalorder %s94, %s95
      %p104 = scmp.eq.s32.totalorder %s21, 0
      %p105 = por %p103, %p104
      %p106 = scmp.ne.s32.totalorder %s94, %s95
      %p107 = scmp.eq.s32.totalorder %s22, 1
      %p108 = por %p106, %p107
      %p110 = scmp.ne.s32.totalorder %s95, %s109
      %p111 = scmp.eq.s32.totalorder %s22, 0
      %p112 = por %p110, %p111
      %s114 = sadd.s32 %s113, 1
      %p117 = scmp.eq.s32.totalorder %s16, 1
      %p118 = scmp.ne.s32.totalorder %s113, %s115
      %p119 = scmp.eq.s32.totalorder %s16, 0
      %p120 = por %p118, %p119
      %p121 = scmp.ne.s32.totalorder %s113, %s115
      %p122 = scmp.eq.s32.totalorder %s21, 1
      %p123 = por %p121, %p122
      %p124 = scmp.ne.s32.totalorder %s115, %s116
      %p125 = scmp.eq.s32.totalorder %s21, 0
      %p126 = por %p124, %p125
      %p127 = scmp.ne.s32.totalorder %s115, %s116
      %p128 = scmp.eq.s32.totalorder %s22, 1
      %p129 = por %p127, %p128
      %p131 = scmp.ne.s32.totalorder %s116, %s130
      %p132 = scmp.eq.s32.totalorder %s22, 0
      %p133 = por %p131, %p132
      %s135 = sadd.s32 %s134, 1
      %p138 = scmp.eq.s32.totalorder %s16, 1
      %p139 = scmp.ne.s32.totalorder %s134, %s136
      %p140 = scmp.eq.s32.totalorder %s16, 0
      %p141 = por %p139, %p140
      %p142 = scmp.ne.s32.totalorder %s134, %s136
      %p143 = scmp.eq.s32.totalorder %s21, 1
      %p144 = por %p142, %p143
      %p145 = scmp.ne.s32.totalorder %s136, %s137
      %p146 = scmp.eq.s32.totalorder %s21, 0
      %p147 = por %p145, %p146
      %p148 = scmp.ne.s32.totalorder %s136, %s137
      %p149 = scmp.eq.s32.totalorder %s22, 1
      %p150 = por %p148, %p149
      %p152 = scmp.ne.s32.totalorder %s137, %s151
      %p153 = scmp.eq.s32.totalorder %s22, 0
      %p154 = por %p152, %p153
      %s156 = sadd.s32 %s155, 1
      %p159 = scmp.eq.s32.totalorder %s16, 1
      %p160 = scmp.ne.s32.totalorder %s155, %s157
      %p161 = scmp.eq.s32.totalorder %s16, 0
      %p162 = por %p160, %p161
      %p163 = scmp.ne.s32.totalorder %s155, %s157
      %p164 = scmp.eq.s32.totalorder %s21, 1
      %p165 = por %p163, %p164
      %p166 = scmp.ne.s32.totalorder %s157, %s158
      %p167 = scmp.eq.s32.totalorder %s21, 0
      %p168 = por %p166, %p167
      %p169 = scmp.ne.s32.totalorder %s157, %s158
      %p170 = scmp.eq.s32.totalorder %s22, 1
      %p171 = por %p169, %p170
      %p173 = scmp.ne.s32.totalorder %s158, %s172
      %p174 = scmp.eq.s32.totalorder %s22, 0
      %p175 = por %p173, %p174
      %s176 = ssub.s32 %s16, %s23
      %p177 = scmp.eq.s32.totalorder %s176, 0
      %s179 = sadd.s32 %s178, 1
      %s180 = scalar_select %p177, %s178, %s179
      %p183 = pneg %p177
      %p184 = scmp.eq.s32.totalorder %s16, 1
      %p185 = por %p183, %p184
      %p186 = scmp.ne.s32.totalorder %s178, %s181
      %p187 = scmp.eq.s32.totalorder %s16, 0
      %p188 = por %p186, %p187
      %p189 = scmp.ne.s32.totalorder %s178, %s181
      %p190 = scmp.eq.s32.totalorder %s21, 1
      %p191 = por %p189, %p190
      %p192 = scmp.ne.s32.totalorder %s181, %s182
      %p193 = scmp.eq.s32.totalorder %s21, 0
      %p194 = por %p192, %p193
      %p195 = scmp.ne.s32.totalorder %s181, %s182
      %p196 = scmp.eq.s32.totalorder %s22, 1
      %p197 = por %p195, %p196
      %p199 = scmp.ne.s32.totalorder %s182, %s198
      %p200 = scmp.eq.s32.totalorder %s22, 0
      %p201 = por %p199, %p200
      %p202 = scmp.le.s32.totalorder 1, %s16
      %p203 = scmp.lt.s32.totalorder %s16, 3
      %p204 = pnand %p202, %p203
      %p205 = pneg %p204
      // Predicated region
      $region9: #{tpu_custom_call.1} parent=5 // pred_check
        _
      $region10: #{tpu_custom_call.1} parent=5 // pred_check_branch
        %207 = sbr.rel (%p204) target = $region12
      $region11: #{tpu_custom_call.1} parent=5 // pred_region
        %s208 = ssub.s32 %s16, 1
        // Predicated region
        $region13: #{tpu_custom_call.1} parent=11 // pred_check
          %p209 = pneg %p63
        $region14: #{tpu_custom_call.1} parent=11 // pred_check_branch
          %211 = sbr.rel (%p209) target = $region16
        $region15: #{tpu_custom_call.1} parent=11 // pred_region
          _
        $region16: #{tpu_custom_call.1} parent=11 // pred_fallthru
          _
        // Predicated region
        $region17: #{tpu_custom_call.1} parent=11 // pred_check
          %p212 = pneg %p84
        $region18: #{tpu_custom_call.1} parent=11 // pred_check_branch
          %214 = sbr.rel (%p212) target = $region20
        $region19: #{tpu_custom_call.1} parent=11 // pred_region
          _
        $region20: #{tpu_custom_call.1} parent=11 // pred_fallthru
          _
        // Predicated region
        $region21: #{tpu_custom_call.1} parent=11 // pred_check
          %p215 = pneg %p105
        $region22: #{tpu_custom_call.1} parent=11 // pred_check_branch
          %217 = sbr.rel (%p215) target = $region24
        $region23: #{tpu_custom_call.1} parent=11 // pred_region
          _
        $region24: #{tpu_custom_call.1} parent=11 // pred_fallthru
          _
        // Predicated region
        $region25: #{tpu_custom_call.1} parent=11 // pred_check
          %p218 = pneg %p126
        $region26: #{tpu_custom_call.1} parent=11 // pred_check_branch
          %220 = sbr.rel (%p218) target = $region28
        $region27: #{tpu_custom_call.1} parent=11 // pred_region
          _
        $region28: #{tpu_custom_call.1} parent=11 // pred_fallthru
          _
        // Predicated region
        $region29: #{tpu_custom_call.1} parent=11 // pred_check
          %p221 = pneg %p147
        $region30: #{tpu_custom_call.1} parent=11 // pred_check_branch
          %223 = sbr.rel (%p221) target = $region32
        $region31: #{tpu_custom_call.1} parent=11 // pred_region
          _
        $region32: #{tpu_custom_call.1} parent=11 // pred_fallthru
          _
        // Predicated region
        $region33: #{tpu_custom_call.1} parent=11 // pred_check
          %p224 = pneg %p168
        $region34: #{tpu_custom_call.1} parent=11 // pred_check_branch
          %226 = sbr.rel (%p224) target = $region36
        $region35: #{tpu_custom_call.1} parent=11 // pred_region
          _
        $region36: #{tpu_custom_call.1} parent=11 // pred_fallthru
          _
      $region12: #{tpu_custom_call.1} parent=5 // pred_fallthru
        _
      %p227 = scmp.lt.s32.totalorder %s16, 2
      // Predicated region
      $region37: #{tpu_custom_call.1} parent=5 // pred_check
        %p228 = pneg %p227
      $region38: #{tpu_custom_call.1} parent=5 // pred_check_branch
        %230 = sbr.rel (%p228) target = $region40
      $region39: #{tpu_custom_call.1} parent=5 // pred_region
        // Predicated region
        $region41: #{tpu_custom_call.1} parent=39 // pred_check
          %p231 = pneg %p36
        $region42: #{tpu_custom_call.1} parent=39 // pred_check_branch
          %233 = sbr.rel (%p231) target = $region44
        $region43: #{tpu_custom_call.1} parent=39 // pred_region
          %s234 = smul.u32 2, %s16
          %p235 = scmp.lt.s32.totalorder %s234, 3
          %s236 = scalar_select %p235, %s234, 3
          %s237 = smul.addr %s236, 8
          %s238 = scalar_lea.vmem %s0, %s237
          %s239 = smul.u32 2, %s16
        $region44: #{tpu_custom_call.1} parent=39 // pred_fallthru
          _
      $region40: #{tpu_custom_call.1} parent=5 // pred_fallthru
        _
      %p240 = scmp.le.s32.totalorder 1, %s16
      %p241 = scmp.lt.s32.totalorder %s16, 3
      %p242 = pnand %p240, %p241
      %p243 = pneg %p242
      // Predicated region
      $region45: #{tpu_custom_call.1} parent=5 // pred_check
        _
      $region46: #{tpu_custom_call.1} parent=5 // pred_check_branch
        %245 = sbr.rel (%p242) target = $region48
      $region47: #{tpu_custom_call.1} parent=5 // pred_region
        %s246 = ssub.s32 %s16, 1
        %s247 = smul.u32 2, %s21
        %p248 = scmp.lt.s32.totalorder %s247, 3
        %s249 = scalar_select %p248, %s247, 3
        %s250 = smul.addr %s249, 8
        %s251 = scalar_lea.vmem %s0, %s250
        %p252 = pneg %p42
        %p253 = pneg %p39
        %p254 = pneg %p63
        %p255 = pneg %p60
        %p256 = pneg %p84
        %p257 = pneg %p81
        %p258 = pneg %p105
        %p259 = pneg %p102
        %p260 = pneg %p126
        %p261 = pneg %p123
        %p262 = pneg %p147
        %p263 = pneg %p144
        %p264 = pneg %p168
        %p265 = pneg %p165
        %p266 = pneg %p194
        %p267 = pneg %p191
        %s268 = sand.u32 %s181, 1
        %s269 = scalar_lea.sflag [#allocation3], %s268
        %s270 = sand.u32 %s181, 1
        %s271 = smul.addr %s270, 16
        %s272 = scalar_lea.vmem [#allocation2], %s271
        %s273 = smul.u32 2, %s21
        %p274 = scmp.lt.s32.totalorder %s273, 3
        %s275 = scalar_select %p274, %s273, 3
        %s276 = smul.addr %s275, 8
        %s277 = scalar_lea.vmem %s0, %s276
        %s278 = smul.u32 2, %s21
        %s279 = smul.u32 2, %s21
        %v281 = vld [vmem:[%s277] sm:$0xff]
        %v282 = vld [vmem:[%s277 + $0x8] sm:$0xff]
        %vm283 = vcmask 523264
        %v284 = vsel %vm283, %v281, 0.0
        %285 = vadd.xlane.f32.xlu0 %v284
        %v286 = vpop.xlane.xlu0 %285
        %v287 = vsel %vm283, %v282, 0.0
        %288 = vadd.xlane.f32.xlu0 %v287
        %v289 = vpop.xlane.xlu0 %288
        %v290 = vrcp.pop 64.0
        %v291 = vmul.f32 %v286, %v290
        %v292 = vmul.f32 %v289, %v290
        %v293 = vsub.f32 %v281, %v291
        %v294 = vsub.f32 %v282, %v292
        %v295 = vmul.f32 %v293, %v293
        %v296 = vmul.f32 %v294, %v294
        %v297 = vsel %vm283, %v295, 0.0
        %298 = vadd.xlane.f32.xlu0 %v297
        %v299 = vpop.xlane.xlu0 %298
        %v300 = vsel %vm283, %v296, 0.0
        %301 = vadd.xlane.f32.xlu0 %v300
        %v302 = vpop.xlane.xlu0 %301
        %v303 = vmul.f32 %v299, %v290
        %v304 = vmul.f32 %v302, %v290
        %v305 = vadd.f32 %v303, 1e-05
        %v306 = vadd.f32 %v304, 1e-05
        %v307 = vrsqrt.pop %v305
        %v308 = vrsqrt.pop %v306
        %v309 = vmul.f32 %v293, %v307
        %v310 = vmul.f32 %v294, %v308
        %v311 = vld [vmem:[%s1] sm:$0x1]
        %v313 = vlaneseq
        %v314 = vshrl.u32 %v313, 7
        %v315 = vsub.s32 0, %v314
        %v316 = vrot.slane %v311, %v315
        %v318 = vmul.f32 %v309, %v316
        %v319 = vmul.f32 %v310, %v316
        %v320 = vld [vmem:[%s2] sm:$0x1]
        %v322 = vlaneseq
        %v323 = vshrl.u32 %v322, 7
        %v324 = vsub.s32 0, %v323
        %v325 = vrot.slane %v320, %v324
        %v327 = vadd.f32 %v318, %v325
        %v328 = vadd.f32 %v319, %v325
        %v329 = vpack.c.bf16 %v328, %v327
        %v330 = vld [vmem:[%s3] sm:$0xf]
        %v331 = vld [vmem:[%s3 + $0x4] sm:$0xf]
        %v332 = vld [vmem:[%s3 + $0x8] sm:$0xf]
        %v333 = vld [vmem:[%s3 + $0xc] sm:$0xf]
        %v334 = vld [vmem:[%s3 + $0x10] sm:$0xf]
        %v335 = vld [vmem:[%s3 + $0x14] sm:$0xf]
        %v336 = vld [vmem:[%s3 + $0x18] sm:$0xf]
        %v337 = vld [vmem:[%s3 + $0x1c] sm:$0xf]
        %v338 = vld [vmem:[%s3 + $0x20] sm:$0xf]
        %v339 = vld [vmem:[%s3 + $0x24] sm:$0xf]
        %v340 = vld [vmem:[%s3 + $0x28] sm:$0xf]
        %v341 = vld [vmem:[%s3 + $0x2c] sm:$0xf]
        %v342 = vld [vmem:[%s3 + $0x30] sm:$0xf]
        %v343 = vld [vmem:[%s3 + $0x34] sm:$0xf]
        %v344 = vld [vmem:[%s3 + $0x38] sm:$0xf]
        %v345 = vld [vmem:[%s3 + $0x3c] sm:$0xf]
        %v346 = vld [vmem:[%s3 + $0x40] sm:$0xf]
        %v347 = vld [vmem:[%s3 + $0x44] sm:$0xf]
        %v348 = vld [vmem:[%s3 + $0x48] sm:$0xf]
        %v349 = vld [vmem:[%s3 + $0x4c] sm:$0xf]
        %v350 = vld [vmem:[%s3 + $0x50] sm:$0xf]
        %v351 = vld [vmem:[%s3 + $0x54] sm:$0xf]
        %v352 = vld [vmem:[%s3 + $0x58] sm:$0xf]
        %v353 = vld [vmem:[%s3 + $0x5c] sm:$0xf]
        %v354 = vld [vmem:[%s3 + $0x60] sm:$0xf]
        %v355 = vld [vmem:[%s3 + $0x64] sm:$0xf]
        %v356 = vld [vmem:[%s3 + $0x68] sm:$0xf]
        %v357 = vld [vmem:[%s3 + $0x6c] sm:$0xf]
        %v358 = vld [vmem:[%s3 + $0x70] sm:$0xf]
        %v359 = vld [vmem:[%s3 + $0x74] sm:$0xf]
        %v360 = vld [vmem:[%s3 + $0x78] sm:$0xf]
        %v361 = vld [vmem:[%s3 + $0x7c] sm:$0xf]
        %v370 = vunpack.c.l.b16 %v330
        %v371 = vunpack.c.l.b16 %v331
        %v372 = vunpack.c.l.b16 %v332
        %v373 = vunpack.c.l.b16 %v333
        %v374 = vunpack.c.l.b16 %v334
        %v375 = vunpack.c.l.b16 %v335
        %v376 = vunpack.c.l.b16 %v336
        %v377 = vunpack.c.l.b16 %v337
        %v378 = vpack.c.b16 %v371, %v370
        %v379 = vpack.c.b16 %v373, %v372
        %v380 = vpack.c.b16 %v375, %v374
        %v381 = vpack.c.b16 %v377, %v376
        %v387 = vsel %vm283, %v329, 0
        %389 = vmatprep.subr.bf16.mxu0 0
        %390 = vmatpush1.bf16.msra.mxu0 0
        %391 = vmatprep.subr.bf16.mxu0 0
        %392 = vmatpush1.bf16.msra.mxu0 0
        %393 = vmatprep.subr.bf16.mxu0 0
        %394 = vmatpush1.bf16.msra.mxu0 0
        %395 = vmatprep.subr.bf16.mxu0 0
        %396 = vmatpush1.bf16.msra.mxu0 0
        %397 = vmatprep.subr.bf16.mxu0 0
        %398 = vmatpush1.bf16.msra.mxu0 %v381
        %399 = vmatprep.subr.bf16.mxu0 0
        %400 = vmatpush1.bf16.msra.mxu0 %v380
        %401 = vmatprep.subr.bf16.mxu0 0
        %402 = vmatpush1.bf16.msra.mxu0 %v379
        %403 = vmatprep.subr.bf16.mxu0 0
        %404 = vmatpush1.bf16.msra.mxu0 %v378
        %405 = vmatprep.subr.bf16.mxu0 0
        %406 = vmatpush2.bf16.msra.mxu0 0
        %407 = vmatprep.subr.bf16.mxu0 0
        %408 = vmatpush2.bf16.msra.mxu0 0
        %409 = vmatprep.subr.bf16.mxu0 0
        %410 = vmatpush2.bf16.msra.mxu0 0
        %411 = vmatprep.subr.bf16.mxu0 0
        %412 = vmatpush2.bf16.msra.mxu0 0
        %413 = vmatprep.subr.bf16.mxu0 0
        %414 = vmatpush2.bf16.msra.mxu0 0
        %415 = vmatprep.subr.bf16.mxu0 0
        %416 = vmatpush2.bf16.msra.mxu0 0
        %417 = vmatprep.subr.bf16.mxu0 0
        %418 = vmatpush2.bf16.msra.mxu0 0
        %419 = vmatprep.subr.bf16.mxu0 0
        %420 = vmatpush2.bf16.msra.mxu0 0
        %421 = vmatprep.mubr.bf16.mxu0 0
        %422 = vmatmul.mubr.bf16.gmra.mxu0 %v387
        %v423 = vpop.f32.mrf.mxu0
        %v424 = vadd.f32 0.0, %v423
        %v425 = vpop.f32.mrf.mxu0
        %v426 = vpop.f32.mrf.mxu0
        %v427 = vadd.f32 0.0, %v426
        %v428 = vpop.f32.mrf.mxu0
        %429 = vdwg.mxu0
        %v438 = vunpack.c.l.b16 %v338
        %v439 = vunpack.c.l.b16 %v339
        %v440 = vunpack.c.l.b16 %v340
        %v441 = vunpack.c.l.b16 %v341
        %v442 = vunpack.c.l.b16 %v342
        %v443 = vunpack.c.l.b16 %v343
        %v444 = vunpack.c.l.b16 %v344
        %v445 = vunpack.c.l.b16 %v345
        %v446 = vpack.c.b16 %v439, %v438
        %v447 = vpack.c.b16 %v441, %v440
        %v448 = vpack.c.b16 %v443, %v442
        %v449 = vpack.c.b16 %v445, %v444
        %454 = vmatprep.subr.bf16.mxu0 0
        %455 = vmatpush1.bf16.msra.mxu0 0
        %456 = vmatprep.subr.bf16.mxu0 0
        %457 = vmatpush1.bf16.msra.mxu0 0
        %458 = vmatprep.subr.bf16.mxu0 0
        %459 = vmatpush1.bf16.msra.mxu0 0
        %460 = vmatprep.subr.bf16.mxu0 0
        %461 = vmatpush1.bf16.msra.mxu0 0
        %462 = vmatprep.subr.bf16.mxu0 0
        %463 = vmatpush1.bf16.msra.mxu0 %v449
        %464 = vmatprep.subr.bf16.mxu0 0
        %465 = vmatpush1.bf16.msra.mxu0 %v448
        %466 = vmatprep.subr.bf16.mxu0 0
        %467 = vmatpush1.bf16.msra.mxu0 %v447
        %468 = vmatprep.subr.bf16.mxu0 0
        %469 = vmatpush1.bf16.msra.mxu0 %v446
        %470 = vmatprep.subr.bf16.mxu0 0
        %471 = vmatpush2.bf16.msra.mxu0 0
        %472 = vmatprep.subr.bf16.mxu0 0
        %473 = vmatpush2.bf16.msra.mxu0 0
        %474 = vmatprep.subr.bf16.mxu0 0
        %475 = vmatpush2.bf16.msra.mxu0 0
        %476 = vmatprep.subr.bf16.mxu0 0
        %477 = vmatpush2.bf16.msra.mxu0 0
        %478 = vmatprep.subr.bf16.mxu0 0
        %479 = vmatpush2.bf16.msra.mxu0 0
        %480 = vmatprep.subr.bf16.mxu0 0
        %481 = vmatpush2.bf16.msra.mxu0 0
        %482 = vmatprep.subr.bf16.mxu0 0
        %483 = vmatpush2.bf16.msra.mxu0 0
        %484 = vmatprep.subr.bf16.mxu0 0
        %485 = vmatpush2.bf16.msra.mxu0 0
        %486 = vmatprep.mubr.bf16.mxu0 0
        %487 = vmatmul.mubr.bf16.gmra.mxu0 %v387
        %v488 = vpop.f32.mrf.mxu0
        %v489 = vadd.f32 0.0, %v488
        %v490 = vpop.f32.mrf.mxu0
        %v491 = vpop.f32.mrf.mxu0
        %v492 = vadd.f32 0.0, %v491
        %v493 = vpop.f32.mrf.mxu0
        %494 = vdwg.mxu0
        %v503 = vunpack.c.l.b16 %v346
        %v504 = vunpack.c.l.b16 %v347
        %v505 = vunpack.c.l.b16 %v348
        %v506 = vunpack.c.l.b16 %v349
        %v507 = vunpack.c.l.b16 %v350
        %v508 = vunpack.c.l.b16 %v351
        %v509 = vunpack.c.l.b16 %v352
        %v510 = vunpack.c.l.b16 %v353
        %v511 = vpack.c.b16 %v504, %v503
        %v512 = vpack.c.b16 %v506, %v505
        %v513 = vpack.c.b16 %v508, %v507
        %v514 = vpack.c.b16 %v510, %v509
        %519 = vmatprep.subr.bf16.mxu0 0
        %520 = vmatpush1.bf16.msra.mxu0 0
        %521 = vmatprep.subr.bf16.mxu0 0
        %522 = vmatpush1.bf16.msra.mxu0 0
        %523 = vmatprep.subr.bf16.mxu0 0
        %524 = vmatpush1.bf16.msra.mxu0 0
        %525 = vmatprep.subr.bf16.mxu0 0
        %526 = vmatpush1.bf16.msra.mxu0 0
        %527 = vmatprep.subr.bf16.mxu0 0
        %528 = vmatpush1.bf16.msra.mxu0 %v514
        %529 = vmatprep.subr.bf16.mxu0 0
        %530 = vmatpush1.bf16.msra.mxu0 %v513
        %531 = vmatprep.subr.bf16.mxu0 0
        %532 = vmatpush1.bf16.msra.mxu0 %v512
        %533 = vmatprep.subr.bf16.mxu0 0
        %534 = vmatpush1.bf16.msra.mxu0 %v511
        %535 = vmatprep.subr.bf16.mxu0 0
        %536 = vmatpush2.bf16.msra.mxu0 0
        %537 = vmatprep.subr.bf16.mxu0 0
        %538 = vmatpush2.bf16.msra.mxu0 0
        %539 = vmatprep.subr.bf16.mxu0 0
        %540 = vmatpush2.bf16.msra.mxu0 0
        %541 = vmatprep.subr.bf16.mxu0 0
        %542 = vmatpush2.bf16.msra.mxu0 0
        %543 = vmatprep.subr.bf16.mxu0 0
        %544 = vmatpush2.bf16.msra.mxu0 0
        %545 = vmatprep.subr.bf16.mxu0 0
        %546 = vmatpush2.bf16.msra.mxu0 0
        %547 = vmatprep.subr.bf16.mxu0 0
        %548 = vmatpush2.bf16.msra.mxu0 0
        %549 = vmatprep.subr.bf16.mxu0 0
        %550 = vmatpush2.bf16.msra.mxu0 0
        %551 = vmatprep.mubr.bf16.mxu0 0
        %552 = vmatmul.mubr.bf16.gmra.mxu0 %v387
        %v553 = vpop.f32.mrf.mxu0
        %v554 = vadd.f32 0.0, %v553
        %v555 = vpop.f32.mrf.mxu0
        %v556 = vpop.f32.mrf.mxu0
        %v557 = vadd.f32 0.0, %v556
        %v558 = vpop.f32.mrf.mxu0
        %559 = vdwg.mxu0
        %v568 = vunpack.c.l.b16 %v354
        %v569 = vunpack.c.l.b16 %v355
        %v570 = vunpack.c.l.b16 %v356
        %v571 = vunpack.c.l.b16 %v357
        %v572 = vunpack.c.l.b16 %v358
        %v573 = vunpack.c.l.b16 %v359
        %v574 = vunpack.c.l.b16 %v360
        %v575 = vunpack.c.l.b16 %v361
        %v576 = vpack.c.b16 %v569, %v568
        %v577 = vpack.c.b16 %v571, %v570
        %v578 = vpack.c.b16 %v573, %v572
        %v579 = vpack.c.b16 %v575, %v574
        %584 = vmatprep.subr.bf16.mxu0 0
        %585 = vmatpush1.bf16.msra.mxu0 0
        %586 = vmatprep.subr.bf16.mxu0 0
        %587 = vmatpush1.bf16.msra.mxu0 0
        %588 = vmatprep.subr.bf16.mxu0 0
        %589 = vmatpush1.bf16.msra.mxu0 0
        %590 = vmatprep.subr.bf16.mxu0 0
        %591 = vmatpush1.bf16.msra.mxu0 0
        %592 = vmatprep.subr.bf16.mxu0 0
        %593 = vmatpush1.bf16.msra.mxu0 %v579
        %594 = vmatprep.subr.bf16.mxu0 0
        %595 = vmatpush1.bf16.msra.mxu0 %v578
        %596 = vmatprep.subr.bf16.mxu0 0
        %597 = vmatpush1.bf16.msra.mxu0 %v577
        %598 = vmatprep.subr.bf16.mxu0 0
        %599 = vmatpush1.bf16.msra.mxu0 %v576
        %600 = vmatprep.subr.bf16.mxu0 0
        %601 = vmatpush2.bf16.msra.mxu0 0
        %602 = vmatprep.subr.bf16.mxu0 0
        %603 = vmatpush2.bf16.msra.mxu0 0
        %604 = vmatprep.subr.bf16.mxu0 0
        %605 = vmatpush2.bf16.msra.mxu0 0
        %606 = vmatprep.subr.bf16.mxu0 0
        %607 = vmatpush2.bf16.msra.mxu0 0
        %608 = vmatprep.subr.bf16.mxu0 0
        %609 = vmatpush2.bf16.msra.mxu0 0
        %610 = vmatprep.subr.bf16.mxu0 0
        %611 = vmatpush2.bf16.msra.mxu0 0
        %612 = vmatprep.subr.bf16.mxu0 0
        %613 = vmatpush2.bf16.msra.mxu0 0
        %614 = vmatprep.subr.bf16.mxu0 0
        %615 = vmatpush2.bf16.msra.mxu0 0
        %616 = vmatprep.mubr.bf16.mxu0 0
        %617 = vmatmul.mubr.bf16.gmra.mxu0 %v387
        %v618 = vpop.f32.mrf.mxu0
        %v619 = vadd.f32 0.0, %v618
        %v620 = vpop.f32.mrf.mxu0
        %v621 = vpop.f32.mrf.mxu0
        %v622 = vadd.f32 0.0, %v621
        %v623 = vpop.f32.mrf.mxu0
        %624 = vdwg.mxu0
        %v625 = vld [vmem:[%s4] sm:$0xf]
        %v626 = vld [vmem:[%s4 + $0x4] sm:$0xf]
        %v627 = vld [vmem:[%s4 + $0x8] sm:$0xf]
        %v628 = vld [vmem:[%s4 + $0xc] sm:$0xf]
        %v629 = vld [vmem:[%s4 + $0x10] sm:$0xf]
        %v630 = vld [vmem:[%s4 + $0x14] sm:$0xf]
        %v631 = vld [vmem:[%s4 + $0x18] sm:$0xf]
        %v632 = vld [vmem:[%s4 + $0x1c] sm:$0xf]
        %v633 = vld [vmem:[%s4 + $0x20] sm:$0xf]
        %v634 = vld [vmem:[%s4 + $0x24] sm:$0xf]
        %v635 = vld [vmem:[%s4 + $0x28] sm:$0xf]
        %v636 = vld [vmem:[%s4 + $0x2c] sm:$0xf]
        %v637 = vld [vmem:[%s4 + $0x30] sm:$0xf]
        %v638 = vld [vmem:[%s4 + $0x34] sm:$0xf]
        %v639 = vld [vmem:[%s4 + $0x38] sm:$0xf]
        %v640 = vld [vmem:[%s4 + $0x3c] sm:$0xf]
        %v641 = vld [vmem:[%s4 + $0x40] sm:$0xf]
        %v642 = vld [vmem:[%s4 + $0x44] sm:$0xf]
        %v643 = vld [vmem:[%s4 + $0x48] sm:$0xf]
        %v644 = vld [vmem:[%s4 + $0x4c] sm:$0xf]
        %v645 = vld [vmem:[%s4 + $0x50] sm:$0xf]
        %v646 = vld [vmem:[%s4 + $0x54] sm:$0xf]
        %v647 = vld [vmem:[%s4 + $0x58] sm:$0xf]
        %v648 = vld [vmem:[%s4 + $0x5c] sm:$0xf]
        %v649 = vld [vmem:[%s4 + $0x60] sm:$0xf]
        %v650 = vld [vmem:[%s4 + $0x64] sm:$0xf]
        %v651 = vld [vmem:[%s4 + $0x68] sm:$0xf]
        %v652 = vld [vmem:[%s4 + $0x6c] sm:$0xf]
        %v653 = vld [vmem:[%s4 + $0x70] sm:$0xf]
        %v654 = vld [vmem:[%s4 + $0x74] sm:$0xf]
        %v655 = vld [vmem:[%s4 + $0x78] sm:$0xf]
        %v656 = vld [vmem:[%s4 + $0x7c] sm:$0xf]
        %v665 = vunpack.c.l.b16 %v625
        %v666 = vunpack.c.l.b16 %v626
        %v667 = vunpack.c.l.b16 %v627
        %v668 = vunpack.c.l.b16 %v628
        %v669 = vunpack.c.l.b16 %v629
        %v670 = vunpack.c.l.b16 %v630
        %v671 = vunpack.c.l.b16 %v631
        %v672 = vunpack.c.l.b16 %v632
        %v673 = vpack.c.b16 %v666, %v665
        %v674 = vpack.c.b16 %v668, %v667
        %v675 = vpack.c.b16 %v670, %v669
        %v676 = vpack.c.b16 %v672, %v671
        %681 = vmatprep.subr.bf16.mxu0 0
        %682 = vmatpush1.bf16.msra.mxu0 0
        %683 = vmatprep.subr.bf16.mxu0 0
        %684 = vmatpush1.bf16.msra.mxu0 0
        %685 = vmatprep.subr.bf16.mxu0 0
        %686 = vmatpush1.bf16.msra.mxu0 0
        %687 = vmatprep.subr.bf16.mxu0 0
        %688 = vmatpush1.bf16.msra.mxu0 0
        %689 = vmatprep.subr.bf16.mxu0 0
        %690 = vmatpush1.bf16.msra.mxu0 %v676
        %691 = vmatprep.subr.bf16.mxu0 0
        %692 = vmatpush1.bf16.msra.mxu0 %v675
        %693 = vmatprep.subr.bf16.mxu0 0
        %694 = vmatpush1.bf16.msra.mxu0 %v674
        %695 = vmatprep.subr.bf16.mxu0 0
        %696 = vmatpush1.bf16.msra.mxu0 %v673
        %697 = vmatprep.subr.bf16.mxu0 0
        %698 = vmatpush2.bf16.msra.mxu0 0
        %699 = vmatprep.subr.bf16.mxu0 0
        %700 = vmatpush2.bf16.msra.mxu0 0
        %701 = vmatprep.subr.bf16.mxu0 0
        %702 = vmatpush2.bf16.msra.mxu0 0
        %703 = vmatprep.subr.bf16.mxu0 0
        %704 = vmatpush2.bf16.msra.mxu0 0
        %705 = vmatprep.subr.bf16.mxu0 0
        %706 = vmatpush2.bf16.msra.mxu0 0
        %707 = vmatprep.subr.bf16.mxu0 0
        %708 = vmatpush2.bf16.msra.mxu0 0
        %709 = vmatprep.subr.bf16.mxu0 0
        %710 = vmatpush2.bf16.msra.mxu0 0
        %711 = vmatprep.subr.bf16.mxu0 0
        %712 = vmatpush2.bf16.msra.mxu0 0
        %713 = vmatprep.mubr.bf16.mxu0 0
        %714 = vmatmul.mubr.bf16.gmra.mxu0 %v387
        %v715 = vpop.f32.mrf.mxu0
        %v716 = vadd.f32 0.0, %v715
        %v717 = vpop.f32.mrf.mxu0
        %v718 = vpop.f32.mrf.mxu0
        %v719 = vadd.f32 0.0, %v718
        %v720 = vpop.f32.mrf.mxu0
        %721 = vdwg.mxu0
        %v730 = vunpack.c.l.b16 %v633
        %v731 = vunpack.c.l.b16 %v634
        %v732 = vunpack.c.l.b16 %v635
        %v733 = vunpack.c.l.b16 %v636
        %v734 = vunpack.c.l.b16 %v637
        %v735 = vunpack.c.l.b16 %v638
        %v736 = vunpack.c.l.b16 %v639
        %v737 = vunpack.c.l.b16 %v640
        %v738 = vpack.c.b16 %v731, %v730
        %v739 = vpack.c.b16 %v733, %v732
        %v740 = vpack.c.b16 %v735, %v734
        %v741 = vpack.c.b16 %v737, %v736
        %746 = vmatprep.subr.bf16.mxu0 0
        %747 = vmatpush1.bf16.msra.mxu0 0
        %748 = vmatprep.subr.bf16.mxu0 0
        %749 = vmatpush1.bf16.msra.mxu0 0
        %750 = vmatprep.subr.bf16.mxu0 0
        %751 = vmatpush1.bf16.msra.mxu0 0
        %752 = vmatprep.subr.bf16.mxu0 0
        %753 = vmatpush1.bf16.msra.mxu0 0
        %754 = vmatprep.subr.bf16.mxu0 0
        %755 = vmatpush1.bf16.msra.mxu0 %v741
        %756 = vmatprep.subr.bf16.mxu0 0
        %757 = vmatpush1.bf16.msra.mxu0 %v740
        %758 = vmatprep.subr.bf16.mxu0 0
        %759 = vmatpush1.bf16.msra.mxu0 %v739
        %760 = vmatprep.subr.bf16.mxu0 0
        %761 = vmatpush1.bf16.msra.mxu0 %v738
        %762 = vmatprep.subr.bf16.mxu0 0
        %763 = vmatpush2.bf16.msra.mxu0 0
        %764 = vmatprep.subr.bf16.mxu0 0
        %765 = vmatpush2.bf16.msra.mxu0 0
        %766 = vmatprep.subr.bf16.mxu0 0
        %767 = vmatpush2.bf16.msra.mxu0 0
        %768 = vmatprep.subr.bf16.mxu0 0
        %769 = vmatpush2.bf16.msra.mxu0 0
        %770 = vmatprep.subr.bf16.mxu0 0
        %771 = vmatpush2.bf16.msra.mxu0 0
        %772 = vmatprep.subr.bf16.mxu0 0
        %773 = vmatpush2.bf16.msra.mxu0 0
        %774 = vmatprep.subr.bf16.mxu0 0
        %775 = vmatpush2.bf16.msra.mxu0 0
        %776 = vmatprep.subr.bf16.mxu0 0
        %777 = vmatpush2.bf16.msra.mxu0 0
        %778 = vmatprep.mubr.bf16.mxu0 0
        %779 = vmatmul.mubr.bf16.gmra.mxu0 %v387
        %v780 = vpop.f32.mrf.mxu0
        %v781 = vadd.f32 0.0, %v780
        %v782 = vpop.f32.mrf.mxu0
        %v783 = vpop.f32.mrf.mxu0
        %v784 = vadd.f32 0.0, %v783
        %v785 = vpop.f32.mrf.mxu0
        %786 = vdwg.mxu0
        %v795 = vunpack.c.l.b16 %v641
        %v796 = vunpack.c.l.b16 %v642
        %v797 = vunpack.c.l.b16 %v643
        %v798 = vunpack.c.l.b16 %v644
        %v799 = vunpack.c.l.b16 %v645
        %v800 = vunpack.c.l.b16 %v646
        %v801 = vunpack.c.l.b16 %v647
        %v802 = vunpack.c.l.b16 %v648
        %v803 = vpack.c.b16 %v796, %v795
        %v804 = vpack.c.b16 %v798, %v797
        %v805 = vpack.c.b16 %v800, %v799
        %v806 = vpack.c.b16 %v802, %v801
        %811 = vmatprep.subr.bf16.mxu0 0
        %812 = vmatpush1.bf16.msra.mxu0 0
        %813 = vmatprep.subr.bf16.mxu0 0
        %814 = vmatpush1.bf16.msra.mxu0 0
        %815 = vmatprep.subr.bf16.mxu0 0
        %816 = vmatpush1.bf16.msra.mxu0 0
        %817 = vmatprep.subr.bf16.mxu0 0
        %818 = vmatpush1.bf16.msra.mxu0 0
        %819 = vmatprep.subr.bf16.mxu0 0
        %820 = vmatpush1.bf16.msra.mxu0 %v806
        %821 = vmatprep.subr.bf16.mxu0 0
        %822 = vmatpush1.bf16.msra.mxu0 %v805
        %823 = vmatprep.subr.bf16.mxu0 0
        %824 = vmatpush1.bf16.msra.mxu0 %v804
        %825 = vmatprep.subr.bf16.mxu0 0
        %826 = vmatpush1.bf16.msra.mxu0 %v803
        %827 = vmatprep.subr.bf16.mxu0 0
        %828 = vmatpush2.bf16.msra.mxu0 0
        %829 = vmatprep.subr.bf16.mxu0 0
        %830 = vmatpush2.bf16.msra.mxu0 0
        %831 = vmatprep.subr.bf16.mxu0 0
        %832 = vmatpush2.bf16.msra.mxu0 0
        %833 = vmatprep.subr.bf16.mxu0 0
        %834 = vmatpush2.bf16.msra.mxu0 0
        %835 = vmatprep.subr.bf16.mxu0 0
        %836 = vmatpush2.bf16.msra.mxu0 0
        %837 = vmatprep.subr.bf16.mxu0 0
        %838 = vmatpush2.bf16.msra.mxu0 0
        %839 = vmatprep.subr.bf16.mxu0 0
        %840 = vmatpush2.bf16.msra.mxu0 0
        %841 = vmatprep.subr.bf16.mxu0 0
        %842 = vmatpush2.bf16.msra.mxu0 0
        %843 = vmatprep.mubr.bf16.mxu0 0
        %844 = vmatmul.mubr.bf16.gmra.mxu0 %v387
        %v845 = vpop.f32.mrf.mxu0
        %v846 = vadd.f32 0.0, %v845
        %v847 = vpop.f32.mrf.mxu0
        %v848 = vpop.f32.mrf.mxu0
        %v849 = vadd.f32 0.0, %v848
        %v850 = vpop.f32.mrf.mxu0
        %851 = vdwg.mxu0
        %v860 = vunpack.c.l.b16 %v649
        %v861 = vunpack.c.l.b16 %v650
        %v862 = vunpack.c.l.b16 %v651
        %v863 = vunpack.c.l.b16 %v652
        %v864 = vunpack.c.l.b16 %v653
        %v865 = vunpack.c.l.b16 %v654
        %v866 = vunpack.c.l.b16 %v655
        %v867 = vunpack.c.l.b16 %v656
        %v868 = vpack.c.b16 %v861, %v860
        %v869 = vpack.c.b16 %v863, %v862
        %v870 = vpack.c.b16 %v865, %v864
        %v871 = vpack.c.b16 %v867, %v866
        %876 = vmatprep.subr.bf16.mxu0 0
        %877 = vmatpush1.bf16.msra.mxu0 0
        %878 = vmatprep.subr.bf16.mxu0 0
        %879 = vmatpush1.bf16.msra.mxu0 0
        %880 = vmatprep.subr.bf16.mxu0 0
        %881 = vmatpush1.bf16.msra.mxu0 0
        %882 = vmatprep.subr.bf16.mxu0 0
        %883 = vmatpush1.bf16.msra.mxu0 0
        %884 = vmatprep.subr.bf16.mxu0 0
        %885 = vmatpush1.bf16.msra.mxu0 %v871
        %886 = vmatprep.subr.bf16.mxu0 0
        %887 = vmatpush1.bf16.msra.mxu0 %v870
        %888 = vmatprep.subr.bf16.mxu0 0
        %889 = vmatpush1.bf16.msra.mxu0 %v869
        %890 = vmatprep.subr.bf16.mxu0 0
        %891 = vmatpush1.bf16.msra.mxu0 %v868
        %892 = vmatprep.subr.bf16.mxu0 0
        %893 = vmatpush2.bf16.msra.mxu0 0
        %894 = vmatprep.subr.bf16.mxu0 0
        %895 = vmatpush2.bf16.msra.mxu0 0
        %896 = vmatprep.subr.bf16.mxu0 0
        %897 = vmatpush2.bf16.msra.mxu0 0
        %898 = vmatprep.subr.bf16.mxu0 0
        %899 = vmatpush2.bf16.msra.mxu0 0
        %900 = vmatprep.subr.bf16.mxu0 0
        %901 = vmatpush2.bf16.msra.mxu0 0
        %902 = vmatprep.subr.bf16.mxu0 0
        %903 = vmatpush2.bf16.msra.mxu0 0
        %904 = vmatprep.subr.bf16.mxu0 0
        %905 = vmatpush2.bf16.msra.mxu0 0
        %906 = vmatprep.subr.bf16.mxu0 0
        %907 = vmatpush2.bf16.msra.mxu0 0
        %908 = vmatprep.mubr.bf16.mxu0 0
        %909 = vmatmul.mubr.bf16.gmra.mxu0 %v387
        %v910 = vpop.f32.mrf.mxu0
        %v911 = vadd.f32 0.0, %v910
        %v912 = vpop.f32.mrf.mxu0
        %v913 = vpop.f32.mrf.mxu0
        %v914 = vadd.f32 0.0, %v913
        %v915 = vpop.f32.mrf.mxu0
        %916 = vdwg.mxu0
        %v917 = vld [vmem:[%s5] sm:$0xf]
        %v918 = vld [vmem:[%s5 + $0x4] sm:$0xf]
        %v919 = vld [vmem:[%s5 + $0x8] sm:$0xf]
        %v920 = vld [vmem:[%s5 + $0xc] sm:$0xf]
        %v921 = vld [vmem:[%s5 + $0x10] sm:$0xf]
        %v922 = vld [vmem:[%s5 + $0x14] sm:$0xf]
        %v923 = vld [vmem:[%s5 + $0x18] sm:$0xf]
        %v924 = vld [vmem:[%s5 + $0x1c] sm:$0xf]
        %v925 = vld [vmem:[%s5 + $0x20] sm:$0xf]
        %v926 = vld [vmem:[%s5 + $0x24] sm:$0xf]
        %v927 = vld [vmem:[%s5 + $0x28] sm:$0xf]
        %v928 = vld [vmem:[%s5 + $0x2c] sm:$0xf]
        %v929 = vld [vmem:[%s5 + $0x30] sm:$0xf]
        %v930 = vld [vmem:[%s5 + $0x34] sm:$0xf]
        %v931 = vld [vmem:[%s5 + $0x38] sm:$0xf]
        %v932 = vld [vmem:[%s5 + $0x3c] sm:$0xf]
        %v933 = vld [vmem:[%s5 + $0x40] sm:$0xf]
        %v934 = vld [vmem:[%s5 + $0x44] sm:$0xf]
        %v935 = vld [vmem:[%s5 + $0x48] sm:$0xf]
        %v936 = vld [vmem:[%s5 + $0x4c] sm:$0xf]
        %v937 = vld [vmem:[%s5 + $0x50] sm:$0xf]
        %v938 = vld [vmem:[%s5 + $0x54] sm:$0xf]
        %v939 = vld [vmem:[%s5 + $0x58] sm:$0xf]
        %v940 = vld [vmem:[%s5 + $0x5c] sm:$0xf]
        %v941 = vld [vmem:[%s5 + $0x60] sm:$0xf]
        %v942 = vld [vmem:[%s5 + $0x64] sm:$0xf]
        %v943 = vld [vmem:[%s5 + $0x68] sm:$0xf]
        %v944 = vld [vmem:[%s5 + $0x6c] sm:$0xf]
        %v945 = vld [vmem:[%s5 + $0x70] sm:$0xf]
        %v946 = vld [vmem:[%s5 + $0x74] sm:$0xf]
        %v947 = vld [vmem:[%s5 + $0x78] sm:$0xf]
        %v948 = vld [vmem:[%s5 + $0x7c] sm:$0xf]
        %v957 = vunpack.c.l.b16 %v917
        %v958 = vunpack.c.l.b16 %v918
        %v959 = vunpack.c.l.b16 %v919
        %v960 = vunpack.c.l.b16 %v920
        %v961 = vunpack.c.l.b16 %v921
        %v962 = vunpack.c.l.b16 %v922
        %v963 = vunpack.c.l.b16 %v923
        %v964 = vunpack.c.l.b16 %v924
        %v965 = vpack.c.b16 %v958, %v957
        %v966 = vpack.c.b16 %v960, %v959
        %v967 = vpack.c.b16 %v962, %v961
        %v968 = vpack.c.b16 %v964, %v963
        %973 = vmatprep.subr.bf16.mxu0 0
        %974 = vmatpush1.bf16.msra.mxu0 0
        %975 = vmatprep.subr.bf16.mxu0 0
        %976 = vmatpush1.bf16.msra.mxu0 0
        %977 = vmatprep.subr.bf16.mxu0 0
        %978 = vmatpush1.bf16.msra.mxu0 0
        %979 = vmatprep.subr.bf16.mxu0 0
        %980 = vmatpush1.bf16.msra.mxu0 0
        %981 = vmatprep.subr.bf16.mxu0 0
        %982 = vmatpush1.bf16.msra.mxu0 %v968
        %983 = vmatprep.subr.bf16.mxu0 0
        %984 = vmatpush1.bf16.msra.mxu0 %v967
        %985 = vmatprep.subr.bf16.mxu0 0
        %986 = vmatpush1.bf16.msra.mxu0 %v966
        %987 = vmatprep.subr.bf16.mxu0 0
        %988 = vmatpush1.bf16.msra.mxu0 %v965
        %989 = vmatprep.subr.bf16.mxu0 0
        %990 = vmatpush2.bf16.msra.mxu0 0
        %991 = vmatprep.subr.bf16.mxu0 0
        %992 = vmatpush2.bf16.msra.mxu0 0
        %993 = vmatprep.subr.bf16.mxu0 0
        %994 = vmatpush2.bf16.msra.mxu0 0
        %995 = vmatprep.subr.bf16.mxu0 0
        %996 = vmatpush2.bf16.msra.mxu0 0
        %997 = vmatprep.subr.bf16.mxu0 0
        %998 = vmatpush2.bf16.msra.mxu0 0
        %999 = vmatprep.subr.bf16.mxu0 0
        %1000 = vmatpush2.bf16.msra.mxu0 0
        %1001 = vmatprep.subr.bf16.mxu0 0
        %1002 = vmatpush2.bf16.msra.mxu0 0
        %1003 = vmatprep.subr.bf16.mxu0 0
        %1004 = vmatpush2.bf16.msra.mxu0 0
        %1005 = vmatprep.mubr.bf16.mxu0 0
        %1006 = vmatmul.mubr.bf16.gmra.mxu0 %v387
        %v1007 = vpop.f32.mrf.mxu0
        %v1008 = vadd.f32 0.0, %v1007
        %v1009 = vpop.f32.mrf.mxu0
        %v1010 = vpop.f32.mrf.mxu0
        %v1011 = vadd.f32 0.0, %v1010
        %v1012 = vpop.f32.mrf.mxu0
        %1013 = vdwg.mxu0
        %v1022 = vunpack.c.l.b16 %v925
        %v1023 = vunpack.c.l.b16 %v926
        %v1024 = vunpack.c.l.b16 %v927
        %v1025 = vunpack.c.l.b16 %v928
        %v1026 = vunpack.c.l.b16 %v929
        %v1027 = vunpack.c.l.b16 %v930
        %v1028 = vunpack.c.l.b16 %v931
        %v1029 = vunpack.c.l.b16 %v932
        %v1030 = vpack.c.b16 %v1023, %v1022
        %v1031 = vpack.c.b16 %v1025, %v1024
        %v1032 = vpack.c.b16 %v1027, %v1026
        %v1033 = vpack.c.b16 %v1029, %v1028
        %1038 = vmatprep.subr.bf16.mxu0 0
        %1039 = vmatpush1.bf16.msra.mxu0 0
        %1040 = vmatprep.subr.bf16.mxu0 0
        %1041 = vmatpush1.bf16.msra.mxu0 0
        %1042 = vmatprep.subr.bf16.mxu0 0
        %1043 = vmatpush1.bf16.msra.mxu0 0
        %1044 = vmatprep.subr.bf16.mxu0 0
        %1045 = vmatpush1.bf16.msra.mxu0 0
        %1046 = vmatprep.subr.bf16.mxu0 0
        %1047 = vmatpush1.bf16.msra.mxu0 %v1033
        %1048 = vmatprep.subr.bf16.mxu0 0
        %1049 = vmatpush1.bf16.msra.mxu0 %v1032
        %1050 = vmatprep.subr.bf16.mxu0 0
        %1051 = vmatpush1.bf16.msra.mxu0 %v1031
        %1052 = vmatprep.subr.bf16.mxu0 0
        %1053 = vmatpush1.bf16.msra.mxu0 %v1030
        %1054 = vmatprep.subr.bf16.mxu0 0
        %1055 = vmatpush2.bf16.msra.mxu0 0
        %1056 = vmatprep.subr.bf16.mxu0 0
        %1057 = vmatpush2.bf16.msra.mxu0 0
        %1058 = vmatprep.subr.bf16.mxu0 0
        %1059 = vmatpush2.bf16.msra.mxu0 0
        %1060 = vmatprep.subr.bf16.mxu0 0
        %1061 = vmatpush2.bf16.msra.mxu0 0
        %1062 = vmatprep.subr.bf16.mxu0 0
        %1063 = vmatpush2.bf16.msra.mxu0 0
        %1064 = vmatprep.subr.bf16.mxu0 0
        %1065 = vmatpush2.bf16.msra.mxu0 0
        %1066 = vmatprep.subr.bf16.mxu0 0
        %1067 = vmatpush2.bf16.msra.mxu0 0
        %1068 = vmatprep.subr.bf16.mxu0 0
        %1069 = vmatpush2.bf16.msra.mxu0 0
        %1070 = vmatprep.mubr.bf16.mxu0 0
        %1071 = vmatmul.mubr.bf16.gmra.mxu0 %v387
        %v1072 = vpop.f32.mrf.mxu0
        %v1073 = vadd.f32 0.0, %v1072
        %v1074 = vpop.f32.mrf.mxu0
        %v1075 = vpop.f32.mrf.mxu0
        %v1076 = vadd.f32 0.0, %v1075
        %v1077 = vpop.f32.mrf.mxu0
        %1078 = vdwg.mxu0
        %v1087 = vunpack.c.l.b16 %v933
        %v1088 = vunpack.c.l.b16 %v934
        %v1089 = vunpack.c.l.b16 %v935
        %v1090 = vunpack.c.l.b16 %v936
        %v1091 = vunpack.c.l.b16 %v937
        %v1092 = vunpack.c.l.b16 %v938
        %v1093 = vunpack.c.l.b16 %v939
        %v1094 = vunpack.c.l.b16 %v940
        %v1095 = vpack.c.b16 %v1088, %v1087
        %v1096 = vpack.c.b16 %v1090, %v1089
        %v1097 = vpack.c.b16 %v1092, %v1091
        %v1098 = vpack.c.b16 %v1094, %v1093
        %1103 = vmatprep.subr.bf16.mxu0 0
        %1104 = vmatpush1.bf16.msra.mxu0 0
        %1105 = vmatprep.subr.bf16.mxu0 0
        %1106 = vmatpush1.bf16.msra.mxu0 0
        %1107 = vmatprep.subr.bf16.mxu0 0
        %1108 = vmatpush1.bf16.msra.mxu0 0
        %1109 = vmatprep.subr.bf16.mxu0 0
        %1110 = vmatpush1.bf16.msra.mxu0 0
        %1111 = vmatprep.subr.bf16.mxu0 0
        %1112 = vmatpush1.bf16.msra.mxu0 %v1098
        %1113 = vmatprep.subr.bf16.mxu0 0
        %1114 = vmatpush1.bf16.msra.mxu0 %v1097
        %1115 = vmatprep.subr.bf16.mxu0 0
        %1116 = vmatpush1.bf16.msra.mxu0 %v1096
        %1117 = vmatprep.subr.bf16.mxu0 0
        %1118 = vmatpush1.bf16.msra.mxu0 %v1095
        %1119 = vmatprep.subr.bf16.mxu0 0
        %1120 = vmatpush2.bf16.msra.mxu0 0
        %1121 = vmatprep.subr.bf16.mxu0 0
        %1122 = vmatpush2.bf16.msra.mxu0 0
        %1123 = vmatprep.subr.bf16.mxu0 0
        %1124 = vmatpush2.bf16.msra.mxu0 0
        %1125 = vmatprep.subr.bf16.mxu0 0
        %1126 = vmatpush2.bf16.msra.mxu0 0
        %1127 = vmatprep.subr.bf16.mxu0 0
        %1128 = vmatpush2.bf16.msra.mxu0 0
        %1129 = vmatprep.subr.bf16.mxu0 0
        %1130 = vmatpush2.bf16.msra.mxu0 0
        %1131 = vmatprep.subr.bf16.mxu0 0
        %1132 = vmatpush2.bf16.msra.mxu0 0
        %1133 = vmatprep.subr.bf16.mxu0 0
        %1134 = vmatpush2.bf16.msra.mxu0 0
        %1135 = vmatprep.mubr.bf16.mxu0 0
        %1136 = vmatmul.mubr.bf16.gmra.mxu0 %v387
        %v1137 = vpop.f32.mrf.mxu0
        %v1138 = vadd.f32 0.0, %v1137
        %v1139 = vpop.f32.mrf.mxu0
        %v1140 = vpop.f32.mrf.mxu0
        %v1141 = vadd.f32 0.0, %v1140
        %v1142 = vpop.f32.mrf.mxu0
        %1143 = vdwg.mxu0
        %v1152 = vunpack.c.l.b16 %v941
        %v1153 = vunpack.c.l.b16 %v942
        %v1154 = vunpack.c.l.b16 %v943
        %v1155 = vunpack.c.l.b16 %v944
        %v1156 = vunpack.c.l.b16 %v945
        %v1157 = vunpack.c.l.b16 %v946
        %v1158 = vunpack.c.l.b16 %v947
        %v1159 = vunpack.c.l.b16 %v948
        %v1160 = vpack.c.b16 %v1153, %v1152
        %v1161 = vpack.c.b16 %v1155, %v1154
        %v1162 = vpack.c.b16 %v1157, %v1156
        %v1163 = vpack.c.b16 %v1159, %v1158
        %1168 = vmatprep.subr.bf16.mxu0 0
        %1169 = vmatpush1.bf16.msra.mxu0 0
        %1170 = vmatprep.subr.bf16.mxu0 0
        %1171 = vmatpush1.bf16.msra.mxu0 0
        %1172 = vmatprep.subr.bf16.mxu0 0
        %1173 = vmatpush1.bf16.msra.mxu0 0
        %1174 = vmatprep.subr.bf16.mxu0 0
        %1175 = vmatpush1.bf16.msra.mxu0 0
        %1176 = vmatprep.subr.bf16.mxu0 0
        %1177 = vmatpush1.bf16.msra.mxu0 %v1163
        %1178 = vmatprep.subr.bf16.mxu0 0
        %1179 = vmatpush1.bf16.msra.mxu0 %v1162
        %1180 = vmatprep.subr.bf16.mxu0 0
        %1181 = vmatpush1.bf16.msra.mxu0 %v1161
        %1182 = vmatprep.subr.bf16.mxu0 0
        %1183 = vmatpush1.bf16.msra.mxu0 %v1160
        %1184 = vmatprep.subr.bf16.mxu0 0
        %1185 = vmatpush2.bf16.msra.mxu0 0
        %1186 = vmatprep.subr.bf16.mxu0 0
        %1187 = vmatpush2.bf16.msra.mxu0 0
        %1188 = vmatprep.subr.bf16.mxu0 0
        %1189 = vmatpush2.bf16.msra.mxu0 0
        %1190 = vmatprep.subr.bf16.mxu0 0
        %1191 = vmatpush2.bf16.msra.mxu0 0
        %1192 = vmatprep.subr.bf16.mxu0 0
        %1193 = vmatpush2.bf16.msra.mxu0 0
        %1194 = vmatprep.subr.bf16.mxu0 0
        %1195 = vmatpush2.bf16.msra.mxu0 0
        %1196 = vmatprep.subr.bf16.mxu0 0
        %1197 = vmatpush2.bf16.msra.mxu0 0
        %1198 = vmatprep.subr.bf16.mxu0 0
        %1199 = vmatpush2.bf16.msra.mxu0 0
        %1200 = vmatprep.mubr.bf16.mxu0 0
        %1201 = vmatmul.mubr.bf16.gmra.mxu0 %v387
        %v1202 = vpop.f32.mrf.mxu0
        %v1203 = vadd.f32 0.0, %v1202
        %v1204 = vpop.f32.mrf.mxu0
        %v1205 = vpop.f32.mrf.mxu0
        %v1206 = vadd.f32 0.0, %v1205
        %v1207 = vpop.f32.mrf.mxu0
        %1208 = vdwg.mxu0
        %v1209 = vpack.c.bf16 %v427, %v424
        %v1210 = vpack.c.bf16 %v492, %v489
        %v1211 = vpack.c.bf16 %v557, %v554
        %v1212 = vpack.c.bf16 %v622, %v619
        %v1217 = vunpack.c.l.b16 %v1209
        %v1218 = vunpack.c.h.b16 %v1209
        %v1219 = vunpack.c.l.b16 %v1210
        %v1220 = vunpack.c.h.b16 %v1210
        %v1221 = vunpack.c.l.b16 %v1211
        %v1222 = vunpack.c.h.b16 %v1211
        %v1223 = vunpack.c.l.b16 %v1212
        %v1224 = vunpack.c.h.b16 %v1212
        %v1225 = vpack.c.b16 %v1217, %v1217
        %v1226 = vpack.c.b16 %v1218, %v1218
        %v1227 = vpack.c.b16 %v1219, %v1219
        %v1228 = vpack.c.b16 %v1220, %v1220
        %v1229 = vpack.c.b16 %v1221, %v1221
        %v1230 = vpack.c.b16 %v1222, %v1222
        %v1231 = vpack.c.b16 %v1223, %v1223
        %v1232 = vpack.c.b16 %v1224, %v1224
        %v1233 = vpack.c.bf16 %v719, %v716
        %v1234 = vpack.c.bf16 %v784, %v781
        %v1235 = vpack.c.bf16 %v849, %v846
        %v1236 = vpack.c.bf16 %v914, %v911
        %v1241 = vunpack.c.l.b16 %v1233
        %v1242 = vunpack.c.h.b16 %v1233
        %v1243 = vunpack.c.l.b16 %v1234
        %v1244 = vunpack.c.h.b16 %v1234
        %v1245 = vunpack.c.l.b16 %v1235
        %v1246 = vunpack.c.h.b16 %v1235
        %v1247 = vunpack.c.l.b16 %v1236
        %v1248 = vunpack.c.h.b16 %v1236
        %v1249 = vpack.c.b16 %v1241, %v1241
        %v1250 = vpack.c.b16 %v1242, %v1242
        %v1251 = vpack.c.b16 %v1243, %v1243
        %v1252 = vpack.c.b16 %v1244, %v1244
        %v1253 = vpack.c.b16 %v1245, %v1245
        %v1254 = vpack.c.b16 %v1246, %v1246
        %v1255 = vpack.c.b16 %v1247, %v1247
        %v1256 = vpack.c.b16 %v1248, %v1248
        %v1257 = vpack.c.bf16 %v1011, %v1008
        %v1258 = vpack.c.bf16 %v1076, %v1073
        %v1259 = vpack.c.bf16 %v1141, %v1138
        %v1260 = vpack.c.bf16 %v1206, %v1203
        %v1265 = vunpack.c.l.b16 %v1257
        %v1266 = vunpack.c.h.b16 %v1257
        %v1267 = vunpack.c.l.b16 %v1258
        %v1268 = vunpack.c.h.b16 %v1258
        %v1269 = vunpack.c.l.b16 %v1259
        %v1270 = vunpack.c.h.b16 %v1259
        %v1271 = vunpack.c.l.b16 %v1260
        %v1272 = vunpack.c.h.b16 %v1260
        %v1273 = vpack.c.b16 %v1265, %v1265
        %v1274 = vpack.c.b16 %v1266, %v1266
        %v1275 = vpack.c.b16 %v1267, %v1267
        %v1276 = vpack.c.b16 %v1268, %v1268
        %v1277 = vpack.c.b16 %v1269, %v1269
        %v1278 = vpack.c.b16 %v1270, %v1270
        %v1279 = vpack.c.b16 %v1271, %v1271
        %v1280 = vpack.c.b16 %v1272, %v1272
        %vm1281 = vcmask 261120
        %v1283 = vsel %vm1281, %v1225, 0
        %v1286 = vsel %vm1281, %v1249, 0
        %1288 = vmatprep.subr.bf16.mxu0 0
        %1289 = vmatpush1.bf16.xpose.msra.mxu0 0
        %1290 = vmatprep.subr.bf16.mxu0 0
        %1291 = vmatpush1.bf16.xpose.msra.mxu0 0
        %1292 = vmatprep.subr.bf16.mxu0 0
        %1293 = vmatpush1.bf16.xpose.msra.mxu0 0
        %1294 = vmatprep.subr.bf16.mxu0 0
        %1295 = vmatpush1.bf16.xpose.msra.mxu0 0
        %1296 = vmatprep.subr.bf16.mxu0 0
        %1297 = vmatpush1.bf16.xpose.msra.mxu0 0
        %1298 = vmatprep.subr.bf16.mxu0 0
        %1299 = vmatpush1.bf16.xpose.msra.mxu0 0
        %1300 = vmatprep.subr.bf16.mxu0 0
        %1301 = vmatpush1.bf16.xpose.msra.mxu0 0
        %1302 = vmatprep.subr.bf16.mxu0 0
        %1303 = vmatpush1.bf16.xpose.msra.mxu0 %v1286
        %1304 = vmatprep.subr.bf16.mxu0 0
        %1305 = vmatpush2.bf16.xpose.msra.mxu0 0
        %1306 = vmatprep.subr.bf16.mxu0 0
        %1307 = vmatpush2.bf16.xpose.msra.mxu0 0
        %1308 = vmatprep.subr.bf16.mxu0 0
        %1309 = vmatpush2.bf16.xpose.msra.mxu0 0
        %1310 = vmatprep.subr.bf16.mxu0 0
        %1311 = vmatpush2.bf16.xpose.msra.mxu0 0
        %1312 = vmatprep.subr.bf16.mxu0 0
        %1313 = vmatpush2.bf16.xpose.msra.mxu0 0
        %1314 = vmatprep.subr.bf16.mxu0 0
        %1315 = vmatpush2.bf16.xpose.msra.mxu0 0
        %1316 = vmatprep.subr.bf16.mxu0 0
        %1317 = vmatpush2.bf16.xpose.msra.mxu0 0
        %1318 = vmatprep.subr.bf16.mxu0 0
        %1319 = vmatpush2.bf16.xpose.msra.mxu0 0
        %1320 = vmatprep.mubr.bf16.mxu0 0
        %1321 = vmatmul.mubr.bf16.gmra.mxu0 %v1283
        %v1322 = vpop.f32.mrf.mxu0
        %v1323 = vadd.f32 0.0, %v1322
        %v1324 = vpop.f32.mrf.mxu0
        %v1325 = vpop.f32.mrf.mxu0
        %v1326 = vpop.f32.mrf.mxu0
        %1327 = vdwg.mxu0
        %v1329 = vsel %vm1281, %v1226, 0
        %v1332 = vsel %vm1281, %v1250, 0
        %1334 = vmatprep.subr.bf16.mxu0 0
        %1335 = vmatpush1.bf16.xpose.msra.mxu0 0
        %1336 = vmatprep.subr.bf16.mxu0 0
        %1337 = vmatpush1.bf16.xpose.msra.mxu0 0
        %1338 = vmatprep.subr.bf16.mxu0 0
        %1339 = vmatpush1.bf16.xpose.msra.mxu0 0
        %1340 = vmatprep.subr.bf16.mxu0 0
        %1341 = vmatpush1.bf16.xpose.msra.mxu0 0
        %1342 = vmatprep.subr.bf16.mxu0 0
        %1343 = vmatpush1.bf16.xpose.msra.mxu0 0
        %1344 = vmatprep.subr.bf16.mxu0 0
        %1345 = vmatpush1.bf16.xpose.msra.mxu0 0
        %1346 = vmatprep.subr.bf16.mxu0 0
        %1347 = vmatpush1.bf16.xpose.msra.mxu0 0
        %1348 = vmatprep.subr.bf16.mxu0 0
        %1349 = vmatpush1.bf16.xpose.msra.mxu0 %v1332
        %1350 = vmatprep.subr.bf16.mxu0 0
        %1351 = vmatpush2.bf16.xpose.msra.mxu0 0
        %1352 = vmatprep.subr.bf16.mxu0 0
        %1353 = vmatpush2.bf16.xpose.msra.mxu0 0
        %1354 = vmatprep.subr.bf16.mxu0 0
        %1355 = vmatpush2.bf16.xpose.msra.mxu0 0
        %1356 = vmatprep.subr.bf16.mxu0 0
        %1357 = vmatpush2.bf16.xpose.msra.mxu0 0
        %1358 = vmatprep.subr.bf16.mxu0 0
        %1359 = vmatpush2.bf16.xpose.msra.mxu0 0
        %1360 = vmatprep.subr.bf16.mxu0 0
        %1361 = vmatpush2.bf16.xpose.msra.mxu0 0
        %1362 = vmatprep.subr.bf16.mxu0 0
        %1363 = vmatpush2.bf16.xpose.msra.mxu0 0
        %1364 = vmatprep.subr.bf16.mxu0 0
        %1365 = vmatpush2.bf16.xpose.msra.mxu0 0
        %1366 = vmatprep.mubr.bf16.mxu0 0
        %1367 = vmatmul.mubr.bf16.gmra.mxu0 %v1329
        %v1368 = vpop.f32.mrf.mxu0
        %v1369 = vadd.f32 0.0, %v1368
        %v1370 = vpop.f32.mrf.mxu0
        %v1371 = vpop.f32.mrf.mxu0
        %v1372 = vpop.f32.mrf.mxu0
        %1373 = vdwg.mxu0
        %v1375 = vsel %vm1281, %v1227, 0
        %v1378 = vsel %vm1281, %v1251, 0
        %1380 = vmatprep.subr.bf16.mxu0 0
        %1381 = vmatpush1.bf16.xpose.msra.mxu0 0
        %1382 = vmatprep.subr.bf16.mxu0 0
        %1383 = vmatpush1.bf16.xpose.msra.mxu0 0
        %1384 = vmatprep.subr.bf16.mxu0 0
        %1385 = vmatpush1.bf16.xpose.msra.mxu0 0
        %1386 = vmatprep.subr.bf16.mxu0 0
        %1387 = vmatpush1.bf16.xpose.msra.mxu0 0
        %1388 = vmatprep.subr.bf16.mxu0 0
        %1389 = vmatpush1.bf16.xpose.msra.mxu0 0
        %1390 = vmatprep.subr.bf16.mxu0 0
        %1391 = vmatpush1.bf16.xpose.msra.mxu0 0
        %1392 = vmatprep.subr.bf16.mxu0 0
        %1393 = vmatpush1.bf16.xpose.msra.mxu0 0
        %1394 = vmatprep.subr.bf16.mxu0 0
        %1395 = vmatpush1.bf16.xpose.msra.mxu0 %v1378
        %1396 = vmatprep.subr.bf16.mxu0 0
        %1397 = vmatpush2.bf16.xpose.msra.mxu0 0
        %1398 = vmatprep.subr.bf16.mxu0 0
        %1399 = vmatpush2.bf16.xpose.msra.mxu0 0
        %1400 = vmatprep.subr.bf16.mxu0 0
        %1401 = vmatpush2.bf16.xpose.msra.mxu0 0
        %1402 = vmatprep.subr.bf16.mxu0 0
        %1403 = vmatpush2.bf16.xpose.msra.mxu0 0
        %1404 = vmatprep.subr.bf16.mxu0 0
        %1405 = vmatpush2.bf16.xpose.msra.mxu0 0
        %1406 = vmatprep.subr.bf16.mxu0 0
        %1407 = vmatpush2.bf16.xpose.msra.mxu0 0
        %1408 = vmatprep.subr.bf16.mxu0 0
        %1409 = vmatpush2.bf16.xpose.msra.mxu0 0
        %1410 = vmatprep.subr.bf16.mxu0 0
        %1411 = vmatpush2.bf16.xpose.msra.mxu0 0
        %1412 = vmatprep.mubr.bf16.mxu0 0
        %1413 = vmatmul.mubr.bf16.gmra.mxu0 %v1375
        %v1414 = vpop.f32.mrf.mxu0
        %v1415 = vadd.f32 0.0, %v1414
        %v1416 = vpop.f32.mrf.mxu0
        %v1417 = vpop.f32.mrf.mxu0
        %v1418 = vpop.f32.mrf.mxu0
        %1419 = vdwg.mxu0
        %v1421 = vsel %vm1281, %v1228, 0
        %v1424 = vsel %vm1281, %v1252, 0
        %1426 = vmatprep.subr.bf16.mxu0 0
        %1427 = vmatpush1.bf16.xpose.msra.mxu0 0
        %1428 = vmatprep.subr.bf16.mxu0 0
        %1429 = vmatpush1.bf16.xpose.msra.mxu0 0
        %1430 = vmatprep.subr.bf16.mxu0 0
        %1431 = vmatpush1.bf16.xpose.msra.mxu0 0
        %1432 = vmatprep.subr.bf16.mxu0 0
        %1433 = vmatpush1.bf16.xpose.msra.mxu0 0
        %1434 = vmatprep.subr.bf16.mxu0 0
        %1435 = vmatpush1.bf16.xpose.msra.mxu0 0
        %1436 = vmatprep.subr.bf16.mxu0 0
        %1437 = vmatpush1.bf16.xpose.msra.mxu0 0
        %1438 = vmatprep.subr.bf16.mxu0 0
        %1439 = vmatpush1.bf16.xpose.msra.mxu0 0
        %1440 = vmatprep.subr.bf16.mxu0 0
        %1441 = vmatpush1.bf16.xpose.msra.mxu0 %v1424
        %1442 = vmatprep.subr.bf16.mxu0 0
        %1443 = vmatpush2.bf16.xpose.msra.mxu0 0
        %1444 = vmatprep.subr.bf16.mxu0 0
        %1445 = vmatpush2.bf16.xpose.msra.mxu0 0
        %1446 = vmatprep.subr.bf16.mxu0 0
        %1447 = vmatpush2.bf16.xpose.msra.mxu0 0
        %1448 = vmatprep.subr.bf16.mxu0 0
        %1449 = vmatpush2.bf16.xpose.msra.mxu0 0
        %1450 = vmatprep.subr.bf16.mxu0 0
        %1451 = vmatpush2.bf16.xpose.msra.mxu0 0
        %1452 = vmatprep.subr.bf16.mxu0 0
        %1453 = vmatpush2.bf16.xpose.msra.mxu0 0
        %1454 = vmatprep.subr.bf16.mxu0 0
        %1455 = vmatpush2.bf16.xpose.msra.mxu0 0
        %1456 = vmatprep.subr.bf16.mxu0 0
        %1457 = vmatpush2.bf16.xpose.msra.mxu0 0
        %1458 = vmatprep.mubr.bf16.mxu0 0
        %1459 = vmatmul.mubr.bf16.gmra.mxu0 %v1421
        %v1460 = vpop.f32.mrf.mxu0
        %v1461 = vadd.f32 0.0, %v1460
        %v1462 = vpop.f32.mrf.mxu0
        %v1463 = vpop.f32.mrf.mxu0
        %v1464 = vpop.f32.mrf.mxu0
        %1465 = vdwg.mxu0
        %v1467 = vsel %vm1281, %v1229, 0
        %v1470 = vsel %vm1281, %v1253, 0
        %1472 = vmatprep.subr.bf16.mxu0 0
        %1473 = vmatpush1.bf16.xpose.msra.mxu0 0
        %1474 = vmatprep.subr.bf16.mxu0 0
        %1475 = vmatpush1.bf16.xpose.msra.mxu0 0
        %1476 = vmatprep.subr.bf16.mxu0 0
        %1477 = vmatpush1.bf16.xpose.msra.mxu0 0
        %1478 = vmatprep.subr.bf16.mxu0 0
        %1479 = vmatpush1.bf16.xpose.msra.mxu0 0
        %1480 = vmatprep.subr.bf16.mxu0 0
        %1481 = vmatpush1.bf16.xpose.msra.mxu0 0
        %1482 = vmatprep.subr.bf16.mxu0 0
        %1483 = vmatpush1.bf16.xpose.msra.mxu0 0
        %1484 = vmatprep.subr.bf16.mxu0 0
        %1485 = vmatpush1.bf16.xpose.msra.mxu0 0
        %1486 = vmatprep.subr.bf16.mxu0 0
        %1487 = vmatpush1.bf16.xpose.msra.mxu0 %v1470
        %1488 = vmatprep.subr.bf16.mxu0 0
        %1489 = vmatpush2.bf16.xpose.msra.mxu0 0
        %1490 = vmatprep.subr.bf16.mxu0 0
        %1491 = vmatpush2.bf16.xpose.msra.mxu0 0
        %1492 = vmatprep.subr.bf16.mxu0 0
        %1493 = vmatpush2.bf16.xpose.msra.mxu0 0
        %1494 = vmatprep.subr.bf16.mxu0 0
        %1495 = vmatpush2.bf16.xpose.msra.mxu0 0
        %1496 = vmatprep.subr.bf16.mxu0 0
        %1497 = vmatpush2.bf16.xpose.msra.mxu0 0
        %1498 = vmatprep.subr.bf16.mxu0 0
        %1499 = vmatpush2.bf16.xpose.msra.mxu0 0
        %1500 = vmatprep.subr.bf16.mxu0 0
        %1501 = vmatpush2.bf16.xpose.msra.mxu0 0
        %1502 = vmatprep.subr.bf16.mxu0 0
        %1503 = vmatpush2.bf16.xpose.msra.mxu0 0
        %1504 = vmatprep.mubr.bf16.mxu0 0
        %1505 = vmatmul.mubr.bf16.gmra.mxu0 %v1467
        %v1506 = vpop.f32.mrf.mxu0
        %v1507 = vadd.f32 0.0, %v1506
        %v1508 = vpop.f32.mrf.mxu0
        %v1509 = vpop.f32.mrf.mxu0
        %v1510 = vpop.f32.mrf.mxu0
        %1511 = vdwg.mxu0
        %v1513 = vsel %vm1281, %v1230, 0
        %v1516 = vsel %vm1281, %v1254, 0
        %1518 = vmatprep.subr.bf16.mxu0 0
        %1519 = vmatpush1.bf16.xpose.msra.mxu0 0
        %1520 = vmatprep.subr.bf16.mxu0 0
        %1521 = vmatpush1.bf16.xpose.msra.mxu0 0
        %1522 = vmatprep.subr.bf16.mxu0 0
        %1523 = vmatpush1.bf16.xpose.msra.mxu0 0
        %1524 = vmatprep.subr.bf16.mxu0 0
        %1525 = vmatpush1.bf16.xpose.msra.mxu0 0
        %1526 = vmatprep.subr.bf16.mxu0 0
        %1527 = vmatpush1.bf16.xpose.msra.mxu0 0
        %1528 = vmatprep.subr.bf16.mxu0 0
        %1529 = vmatpush1.bf16.xpose.msra.mxu0 0
        %1530 = vmatprep.subr.bf16.mxu0 0
        %1531 = vmatpush1.bf16.xpose.msra.mxu0 0
        %1532 = vmatprep.subr.bf16.mxu0 0
        %1533 = vmatpush1.bf16.xpose.msra.mxu0 %v1516
        %1534 = vmatprep.subr.bf16.mxu0 0
        %1535 = vmatpush2.bf16.xpose.msra.mxu0 0
        %1536 = vmatprep.subr.bf16.mxu0 0
        %1537 = vmatpush2.bf16.xpose.msra.mxu0 0
        %1538 = vmatprep.subr.bf16.mxu0 0
        %1539 = vmatpush2.bf16.xpose.msra.mxu0 0
        %1540 = vmatprep.subr.bf16.mxu0 0
        %1541 = vmatpush2.bf16.xpose.msra.mxu0 0
        %1542 = vmatprep.subr.bf16.mxu0 0
        %1543 = vmatpush2.bf16.xpose.msra.mxu0 0
        %1544 = vmatprep.subr.bf16.mxu0 0
        %1545 = vmatpush2.bf16.xpose.msra.mxu0 0
        %1546 = vmatprep.subr.bf16.mxu0 0
        %1547 = vmatpush2.bf16.xpose.msra.mxu0 0
        %1548 = vmatprep.subr.bf16.mxu0 0
        %1549 = vmatpush2.bf16.xpose.msra.mxu0 0
        %1550 = vmatprep.mubr.bf16.mxu0 0
        %1551 = vmatmul.mubr.bf16.gmra.mxu0 %v1513
        %v1552 = vpop.f32.mrf.mxu0
        %v1553 = vadd.f32 0.0, %v1552
        %v1554 = vpop.f32.mrf.mxu0
        %v1555 = vpop.f32.mrf.mxu0
        %v1556 = vpop.f32.mrf.mxu0
        %1557 = vdwg.mxu0
        %v1559 = vsel %vm1281, %v1231, 0
        %v1562 = vsel %vm1281, %v1255, 0
        %1564 = vmatprep.subr.bf16.mxu0 0
        %1565 = vmatpush1.bf16.xpose.msra.mxu0 0
        %1566 = vmatprep.subr.bf16.mxu0 0
        %1567 = vmatpush1.bf16.xpose.msra.mxu0 0
        %1568 = vmatprep.subr.bf16.mxu0 0
        %1569 = vmatpush1.bf16.xpose.msra.mxu0 0
        %1570 = vmatprep.subr.bf16.mxu0 0
        %1571 = vmatpush1.bf16.xpose.msra.mxu0 0
        %1572 = vmatprep.subr.bf16.mxu0 0
        %1573 = vmatpush1.bf16.xpose.msra.mxu0 0
        %1574 = vmatprep.subr.bf16.mxu0 0
        %1575 = vmatpush1.bf16.xpose.msra.mxu0 0
        %1576 = vmatprep.subr.bf16.mxu0 0
        %1577 = vmatpush1.bf16.xpose.msra.mxu0 0
        %1578 = vmatprep.subr.bf16.mxu0 0
        %1579 = vmatpush1.bf16.xpose.msra.mxu0 %v1562
        %1580 = vmatprep.subr.bf16.mxu0 0
        %1581 = vmatpush2.bf16.xpose.msra.mxu0 0
        %1582 = vmatprep.subr.bf16.mxu0 0
        %1583 = vmatpush2.bf16.xpose.msra.mxu0 0
        %1584 = vmatprep.subr.bf16.mxu0 0
        %1585 = vmatpush2.bf16.xpose.msra.mxu0 0
        %1586 = vmatprep.subr.bf16.mxu0 0
        %1587 = vmatpush2.bf16.xpose.msra.mxu0 0
        %1588 = vmatprep.subr.bf16.mxu0 0
        %1589 = vmatpush2.bf16.xpose.msra.mxu0 0
        %1590 = vmatprep.subr.bf16.mxu0 0
        %1591 = vmatpush2.bf16.xpose.msra.mxu0 0
        %1592 = vmatprep.subr.bf16.mxu0 0
        %1593 = vmatpush2.bf16.xpose.msra.mxu0 0
        %1594 = vmatprep.subr.bf16.mxu0 0
        %1595 = vmatpush2.bf16.xpose.msra.mxu0 0
        %1596 = vmatprep.mubr.bf16.mxu0 0
        %1597 = vmatmul.mubr.bf16.gmra.mxu0 %v1559
        %v1598 = vpop.f32.mrf.mxu0
        %v1599 = vadd.f32 0.0, %v1598
        %v1600 = vpop.f32.mrf.mxu0
        %v1601 = vpop.f32.mrf.mxu0
        %v1602 = vpop.f32.mrf.mxu0
        %1603 = vdwg.mxu0
        %v1605 = vsel %vm1281, %v1232, 0
        %v1608 = vsel %vm1281, %v1256, 0
        %1610 = vmatprep.subr.bf16.mxu0 0
        %1611 = vmatpush1.bf16.xpose.msra.mxu0 0
        %1612 = vmatprep.subr.bf16.mxu0 0
        %1613 = vmatpush1.bf16.xpose.msra.mxu0 0
        %1614 = vmatprep.subr.bf16.mxu0 0
        %1615 = vmatpush1.bf16.xpose.msra.mxu0 0
        %1616 = vmatprep.subr.bf16.mxu0 0
        %1617 = vmatpush1.bf16.xpose.msra.mxu0 0
        %1618 = vmatprep.subr.bf16.mxu0 0
        %1619 = vmatpush1.bf16.xpose.msra.mxu0 0
        %1620 = vmatprep.subr.bf16.mxu0 0
        %1621 = vmatpush1.bf16.xpose.msra.mxu0 0
        %1622 = vmatprep.subr.bf16.mxu0 0
        %1623 = vmatpush1.bf16.xpose.msra.mxu0 0
        %1624 = vmatprep.subr.bf16.mxu0 0
        %1625 = vmatpush1.bf16.xpose.msra.mxu0 %v1608
        %1626 = vmatprep.subr.bf16.mxu0 0
        %1627 = vmatpush2.bf16.xpose.msra.mxu0 0
        %1628 = vmatprep.subr.bf16.mxu0 0
        %1629 = vmatpush2.bf16.xpose.msra.mxu0 0
        %1630 = vmatprep.subr.bf16.mxu0 0
        %1631 = vmatpush2.bf16.xpose.msra.mxu0 0
        %1632 = vmatprep.subr.bf16.mxu0 0
        %1633 = vmatpush2.bf16.xpose.msra.mxu0 0
        %1634 = vmatprep.subr.bf16.mxu0 0
        %1635 = vmatpush2.bf16.xpose.msra.mxu0 0
        %1636 = vmatprep.subr.bf16.mxu0 0
        %1637 = vmatpush2.bf16.xpose.msra.mxu0 0
        %1638 = vmatprep.subr.bf16.mxu0 0
        %1639 = vmatpush2.bf16.xpose.msra.mxu0 0
        %1640 = vmatprep.subr.bf16.mxu0 0
        %1641 = vmatpush2.bf16.xpose.msra.mxu0 0
        %1642 = vmatprep.mubr.bf16.mxu0 0
        %1643 = vmatmul.mubr.bf16.gmra.mxu0 %v1605
        %v1644 = vpop.f32.mrf.mxu0
        %v1645 = vadd.f32 0.0, %v1644
        %v1646 = vpop.f32.mrf.mxu0
        %v1647 = vpop.f32.mrf.mxu0
        %v1648 = vpop.f32.mrf.mxu0
        %1649 = vdwg.mxu0
        %v1650 = vmul.f32 %v1323, 0.17677669
        %v1651 = vmul.f32 %v1369, 0.17677669
        %v1652 = vmul.f32 %v1415, 0.17677669
        %v1653 = vmul.f32 %v1461, 0.17677669
        %v1654 = vmul.f32 %v1507, 0.17677669
        %v1655 = vmul.f32 %v1553, 0.17677669
        %v1656 = vmul.f32 %v1599, 0.17677669
        %v1657 = vmul.f32 %v1645, 0.17677669
        %v1658 = vlaneseq
        %v1659 = vshrl.u32 %v1658, 7
        %v1660 = vlaneseq
        %v1661 = vand.u32 %v1660, 127
        %vm1662 = vcmp.le.s32.totalorder %v1661, %v1659
        %v1663 = vsel %vm1662, 1, 0
        %vm1664 = vcmp.eq.s32.totalorder %v1663, 1
        %v1665 = vsel %vm1664, %v1650, -1e+30
        %v1666 = vsel %vm1664, %v1651, -1e+30
        %v1667 = vsel %vm1664, %v1652, -1e+30
        %v1668 = vsel %vm1664, %v1653, -1e+30
        %v1669 = vsel %vm1664, %v1654, -1e+30
        %v1670 = vsel %vm1664, %v1655, -1e+30
        %v1671 = vsel %vm1664, %v1656, -1e+30
        %v1672 = vsel %vm1664, %v1657, -1e+30
        %vm1673 = vcmask 64512
        %v1674 = vsel %vm1673, %v1665, -inf
        %1675 = vmax.xlane.f32.xlu0 %v1674
        %v1676 = vpop.xlane.xlu0 %1675
        %v1677 = vsel %vm1673, %v1666, -inf
        %1678 = vmax.xlane.f32.xlu0 %v1677
        %v1679 = vpop.xlane.xlu0 %1678
        %v1680 = vsel %vm1673, %v1667, -inf
        %1681 = vmax.xlane.f32.xlu0 %v1680
        %v1682 = vpop.xlane.xlu0 %1681
        %v1683 = vsel %vm1673, %v1668, -inf
        %1684 = vmax.xlane.f32.xlu0 %v1683
        %v1685 = vpop.xlane.xlu0 %1684
        %v1686 = vsel %vm1673, %v1669, -inf
        %1687 = vmax.xlane.f32.xlu0 %v1686
        %v1688 = vpop.xlane.xlu0 %1687
        %v1689 = vsel %vm1673, %v1670, -inf
        %1690 = vmax.xlane.f32.xlu0 %v1689
        %v1691 = vpop.xlane.xlu0 %1690
        %v1692 = vsel %vm1673, %v1671, -inf
        %1693 = vmax.xlane.f32.xlu0 %v1692
        %v1694 = vpop.xlane.xlu0 %1693
        %v1695 = vsel %vm1673, %v1672, -inf
        %1696 = vmax.xlane.f32.xlu0 %v1695
        %v1697 = vpop.xlane.xlu0 %1696
        %v1698 = vsub.f32 %v1665, %v1676
        %v1699 = vsub.f32 %v1666, %v1679
        %v1700 = vsub.f32 %v1667, %v1682
        %v1701 = vsub.f32 %v1668, %v1685
        %v1702 = vsub.f32 %v1669, %v1688
        %v1703 = vsub.f32 %v1670, %v1691
        %v1704 = vsub.f32 %v1671, %v1694
        %v1705 = vsub.f32 %v1672, %v1697
        %v1706 = vmul.f32 %v1698, 1.442695
        %v1707 = vpow.pop %v1706
        %v1708 = vmul.f32 %v1699, 1.442695
        %v1709 = vpow.pop %v1708
        %v1710 = vmul.f32 %v1700, 1.442695
        %v1711 = vpow.pop %v1710
        %v1712 = vmul.f32 %v1701, 1.442695
        %v1713 = vpow.pop %v1712
        %v1714 = vmul.f32 %v1702, 1.442695
        %v1715 = vpow.pop %v1714
        %v1716 = vmul.f32 %v1703, 1.442695
        %v1717 = vpow.pop %v1716
        %v1718 = vmul.f32 %v1704, 1.442695
        %v1719 = vpow.pop %v1718
        %v1720 = vmul.f32 %v1705, 1.442695
        %v1721 = vpow.pop %v1720
        %v1722 = vsel %vm1673, %v1707, 0.0
        %1723 = vadd.xlane.f32.xlu0 %v1722
        %v1724 = vpop.xlane.xlu0 %1723
        %v1725 = vsel %vm1673, %v1709, 0.0
        %1726 = vadd.xlane.f32.xlu0 %v1725
        %v1727 = vpop.xlane.xlu0 %1726
        %v1728 = vsel %vm1673, %v1711, 0.0
        %1729 = vadd.xlane.f32.xlu0 %v1728
        %v1730 = vpop.xlane.xlu0 %1729
        %v1731 = vsel %vm1673, %v1713, 0.0
        %1732 = vadd.xlane.f32.xlu0 %v1731
        %v1733 = vpop.xlane.xlu0 %1732
        %v1734 = vsel %vm1673, %v1715, 0.0
        %1735 = vadd.xlane.f32.xlu0 %v1734
        %v1736 = vpop.xlane.xlu0 %1735
        %v1737 = vsel %vm1673, %v1717, 0.0
        %1738 = vadd.xlane.f32.xlu0 %v1737
        %v1739 = vpop.xlane.xlu0 %1738
        %v1740 = vsel %vm1673, %v1719, 0.0
        %1741 = vadd.xlane.f32.xlu0 %v1740
        %v1742 = vpop.xlane.xlu0 %1741
        %v1743 = vsel %vm1673, %v1721, 0.0
        %1744 = vadd.xlane.f32.xlu0 %v1743
        %v1745 = vpop.xlane.xlu0 %1744
        %v1746 = vrcp.pop %v1724
        %v1747 = vrcp.pop %v1727
        %v1748 = vrcp.pop %v1730
        %v1749 = vrcp.pop %v1733
        %v1750 = vrcp.pop %v1736
        %v1751 = vrcp.pop %v1739
        %v1752 = vrcp.pop %v1742
        %v1753 = vrcp.pop %v1745
        %v1754 = vmul.f32 %v1707, %v1746
        %v1755 = vmul.f32 %v1709, %v1747
        %v1756 = vmul.f32 %v1711, %v1748
        %v1757 = vmul.f32 %v1713, %v1749
        %v1758 = vmul.f32 %v1715, %v1750
        %v1759 = vmul.f32 %v1717, %v1751
        %v1760 = vmul.f32 %v1719, %v1752
        %v1761 = vmul.f32 %v1721, %v1753
        %v1762 = vpack.c.bf16 %v1754, %v1754
        %v1763 = vpack.c.bf16 %v1755, %v1755
        %v1764 = vpack.c.bf16 %v1756, %v1756
        %v1765 = vpack.c.bf16 %v1757, %v1757
        %v1766 = vpack.c.bf16 %v1758, %v1758
        %v1767 = vpack.c.bf16 %v1759, %v1759
        %v1768 = vpack.c.bf16 %v1760, %v1760
        %v1769 = vpack.c.bf16 %v1761, %v1761
        %v1771 = vsel %vm1673, %v1762, 0
        %vm1773 = vcmask 1043456
        %v1775 = vsel %vm1773, %v1273, 0
        %1777 = vmatprep.subr.bf16.mxu0 0
        %1778 = vmatpush1.bf16.msra.mxu0 0
        %1779 = vmatprep.subr.bf16.mxu0 0
        %1780 = vmatpush1.bf16.msra.mxu0 0
        %1781 = vmatprep.subr.bf16.mxu0 0
        %1782 = vmatpush1.bf16.msra.mxu0 0
        %1783 = vmatprep.subr.bf16.mxu0 0
        %1784 = vmatpush1.bf16.msra.mxu0 0
        %1785 = vmatprep.subr.bf16.mxu0 0
        %1786 = vmatpush1.bf16.msra.mxu0 0
        %1787 = vmatprep.subr.bf16.mxu0 0
        %1788 = vmatpush1.bf16.msra.mxu0 0
        %1789 = vmatprep.subr.bf16.mxu0 0
        %1790 = vmatpush1.bf16.msra.mxu0 0
        %1791 = vmatprep.subr.bf16.mxu0 0
        %1792 = vmatpush1.bf16.msra.mxu0 %v1775
        %1793 = vmatprep.subr.bf16.mxu0 0
        %1794 = vmatpush2.bf16.msra.mxu0 0
        %1795 = vmatprep.subr.bf16.mxu0 0
        %1796 = vmatpush2.bf16.msra.mxu0 0
        %1797 = vmatprep.subr.bf16.mxu0 0
        %1798 = vmatpush2.bf16.msra.mxu0 0
        %1799 = vmatprep.subr.bf16.mxu0 0
        %1800 = vmatpush2.bf16.msra.mxu0 0
        %1801 = vmatprep.subr.bf16.mxu0 0
        %1802 = vmatpush2.bf16.msra.mxu0 0
        %1803 = vmatprep.subr.bf16.mxu0 0
        %1804 = vmatpush2.bf16.msra.mxu0 0
        %1805 = vmatprep.subr.bf16.mxu0 0
        %1806 = vmatpush2.bf16.msra.mxu0 0
        %1807 = vmatprep.subr.bf16.mxu0 0
        %1808 = vmatpush2.bf16.msra.mxu0 0
        %1809 = vmatprep.mubr.bf16.mxu0 0
        %1810 = vmatmul.mubr.bf16.gmra.mxu0 %v1771
        %v1811 = vpop.f32.mrf.mxu0
        %v1812 = vadd.f32 0.0, %v1811
        %v1813 = vpop.f32.mrf.mxu0
        %v1814 = vpop.f32.mrf.mxu0
        %v1815 = vpop.f32.mrf.mxu0
        %1816 = vdwg.mxu0
        %v1818 = vsel %vm1673, %v1763, 0
        %v1821 = vsel %vm1773, %v1274, 0
        %1823 = vmatprep.subr.bf16.mxu0 0
        %1824 = vmatpush1.bf16.msra.mxu0 0
        %1825 = vmatprep.subr.bf16.mxu0 0
        %1826 = vmatpush1.bf16.msra.mxu0 0
        %1827 = vmatprep.subr.bf16.mxu0 0
        %1828 = vmatpush1.bf16.msra.mxu0 0
        %1829 = vmatprep.subr.bf16.mxu0 0
        %1830 = vmatpush1.bf16.msra.mxu0 0
        %1831 = vmatprep.subr.bf16.mxu0 0
        %1832 = vmatpush1.bf16.msra.mxu0 0
        %1833 = vmatprep.subr.bf16.mxu0 0
        %1834 = vmatpush1.bf16.msra.mxu0 0
        %1835 = vmatprep.subr.bf16.mxu0 0
        %1836 = vmatpush1.bf16.msra.mxu0 0
        %1837 = vmatprep.subr.bf16.mxu0 0
        %1838 = vmatpush1.bf16.msra.mxu0 %v1821
        %1839 = vmatprep.subr.bf16.mxu0 0
        %1840 = vmatpush2.bf16.msra.mxu0 0
        %1841 = vmatprep.subr.bf16.mxu0 0
        %1842 = vmatpush2.bf16.msra.mxu0 0
        %1843 = vmatprep.subr.bf16.mxu0 0
        %1844 = vmatpush2.bf16.msra.mxu0 0
        %1845 = vmatprep.subr.bf16.mxu0 0
        %1846 = vmatpush2.bf16.msra.mxu0 0
        %1847 = vmatprep.subr.bf16.mxu0 0
        %1848 = vmatpush2.bf16.msra.mxu0 0
        %1849 = vmatprep.subr.bf16.mxu0 0
        %1850 = vmatpush2.bf16.msra.mxu0 0
        %1851 = vmatprep.subr.bf16.mxu0 0
        %1852 = vmatpush2.bf16.msra.mxu0 0
        %1853 = vmatprep.subr.bf16.mxu0 0
        %1854 = vmatpush2.bf16.msra.mxu0 0
        %1855 = vmatprep.mubr.bf16.mxu0 0
        %1856 = vmatmul.mubr.bf16.gmra.mxu0 %v1818
        %v1857 = vpop.f32.mrf.mxu0
        %v1858 = vadd.f32 0.0, %v1857
        %v1859 = vpop.f32.mrf.mxu0
        %v1860 = vpop.f32.mrf.mxu0
        %v1861 = vpop.f32.mrf.mxu0
        %1862 = vdwg.mxu0
        %v1864 = vsel %vm1673, %v1764, 0
        %v1867 = vsel %vm1773, %v1275, 0
        %1869 = vmatprep.subr.bf16.mxu0 0
        %1870 = vmatpush1.bf16.msra.mxu0 0
        %1871 = vmatprep.subr.bf16.mxu0 0
        %1872 = vmatpush1.bf16.msra.mxu0 0
        %1873 = vmatprep.subr.bf16.mxu0 0
        %1874 = vmatpush1.bf16.msra.mxu0 0
        %1875 = vmatprep.subr.bf16.mxu0 0
        %1876 = vmatpush1.bf16.msra.mxu0 0
        %1877 = vmatprep.subr.bf16.mxu0 0
        %1878 = vmatpush1.bf16.msra.mxu0 0
        %1879 = vmatprep.subr.bf16.mxu0 0
        %1880 = vmatpush1.bf16.msra.mxu0 0
        %1881 = vmatprep.subr.bf16.mxu0 0
        %1882 = vmatpush1.bf16.msra.mxu0 0
        %1883 = vmatprep.subr.bf16.mxu0 0
        %1884 = vmatpush1.bf16.msra.mxu0 %v1867
        %1885 = vmatprep.subr.bf16.mxu0 0
        %1886 = vmatpush2.bf16.msra.mxu0 0
        %1887 = vmatprep.subr.bf16.mxu0 0
        %1888 = vmatpush2.bf16.msra.mxu0 0
        %1889 = vmatprep.subr.bf16.mxu0 0
        %1890 = vmatpush2.bf16.msra.mxu0 0
        %1891 = vmatprep.subr.bf16.mxu0 0
        %1892 = vmatpush2.bf16.msra.mxu0 0
        %1893 = vmatprep.subr.bf16.mxu0 0
        %1894 = vmatpush2.bf16.msra.mxu0 0
        %1895 = vmatprep.subr.bf16.mxu0 0
        %1896 = vmatpush2.bf16.msra.mxu0 0
        %1897 = vmatprep.subr.bf16.mxu0 0
        %1898 = vmatpush2.bf16.msra.mxu0 0
        %1899 = vmatprep.subr.bf16.mxu0 0
        %1900 = vmatpush2.bf16.msra.mxu0 0
        %1901 = vmatprep.mubr.bf16.mxu0 0
        %1902 = vmatmul.mubr.bf16.gmra.mxu0 %v1864
        %v1903 = vpop.f32.mrf.mxu0
        %v1904 = vadd.f32 0.0, %v1903
        %v1905 = vpop.f32.mrf.mxu0
        %v1906 = vpop.f32.mrf.mxu0
        %v1907 = vpop.f32.mrf.mxu0
        %1908 = vdwg.mxu0
        %v1910 = vsel %vm1673, %v1765, 0
        %v1913 = vsel %vm1773, %v1276, 0
        %1915 = vmatprep.subr.bf16.mxu0 0
        %1916 = vmatpush1.bf16.msra.mxu0 0
        %1917 = vmatprep.subr.bf16.mxu0 0
        %1918 = vmatpush1.bf16.msra.mxu0 0
        %1919 = vmatprep.subr.bf16.mxu0 0
        %1920 = vmatpush1.bf16.msra.mxu0 0
        %1921 = vmatprep.subr.bf16.mxu0 0
        %1922 = vmatpush1.bf16.msra.mxu0 0
        %1923 = vmatprep.subr.bf16.mxu0 0
        %1924 = vmatpush1.bf16.msra.mxu0 0
        %1925 = vmatprep.subr.bf16.mxu0 0
        %1926 = vmatpush1.bf16.msra.mxu0 0
        %1927 = vmatprep.subr.bf16.mxu0 0
        %1928 = vmatpush1.bf16.msra.mxu0 0
        %1929 = vmatprep.subr.bf16.mxu0 0
        %1930 = vmatpush1.bf16.msra.mxu0 %v1913
        %1931 = vmatprep.subr.bf16.mxu0 0
        %1932 = vmatpush2.bf16.msra.mxu0 0
        %1933 = vmatprep.subr.bf16.mxu0 0
        %1934 = vmatpush2.bf16.msra.mxu0 0
        %1935 = vmatprep.subr.bf16.mxu0 0
        %1936 = vmatpush2.bf16.msra.mxu0 0
        %1937 = vmatprep.subr.bf16.mxu0 0
        %1938 = vmatpush2.bf16.msra.mxu0 0
        %1939 = vmatprep.subr.bf16.mxu0 0
        %1940 = vmatpush2.bf16.msra.mxu0 0
        %1941 = vmatprep.subr.bf16.mxu0 0
        %1942 = vmatpush2.bf16.msra.mxu0 0
        %1943 = vmatprep.subr.bf16.mxu0 0
        %1944 = vmatpush2.bf16.msra.mxu0 0
        %1945 = vmatprep.subr.bf16.mxu0 0
        %1946 = vmatpush2.bf16.msra.mxu0 0
        %1947 = vmatprep.mubr.bf16.mxu0 0
        %1948 = vmatmul.mubr.bf16.gmra.mxu0 %v1910
        %v1949 = vpop.f32.mrf.mxu0
        %v1950 = vadd.f32 0.0, %v1949
        %v1951 = vpop.f32.mrf.mxu0
        %v1952 = vpop.f32.mrf.mxu0
        %v1953 = vpop.f32.mrf.mxu0
        %1954 = vdwg.mxu0
        %v1956 = vsel %vm1673, %v1766, 0
        %v1959 = vsel %vm1773, %v1277, 0
        %1961 = vmatprep.subr.bf16.mxu0 0
        %1962 = vmatpush1.bf16.msra.mxu0 0
        %1963 = vmatprep.subr.bf16.mxu0 0
        %1964 = vmatpush1.bf16.msra.mxu0 0
        %1965 = vmatprep.subr.bf16.mxu0 0
        %1966 = vmatpush1.bf16.msra.mxu0 0
        %1967 = vmatprep.subr.bf16.mxu0 0
        %1968 = vmatpush1.bf16.msra.mxu0 0
        %1969 = vmatprep.subr.bf16.mxu0 0
        %1970 = vmatpush1.bf16.msra.mxu0 0
        %1971 = vmatprep.subr.bf16.mxu0 0
        %1972 = vmatpush1.bf16.msra.mxu0 0
        %1973 = vmatprep.subr.bf16.mxu0 0
        %1974 = vmatpush1.bf16.msra.mxu0 0
        %1975 = vmatprep.subr.bf16.mxu0 0
        %1976 = vmatpush1.bf16.msra.mxu0 %v1959
        %1977 = vmatprep.subr.bf16.mxu0 0
        %1978 = vmatpush2.bf16.msra.mxu0 0
        %1979 = vmatprep.subr.bf16.mxu0 0
        %1980 = vmatpush2.bf16.msra.mxu0 0
        %1981 = vmatprep.subr.bf16.mxu0 0
        %1982 = vmatpush2.bf16.msra.mxu0 0
        %1983 = vmatprep.subr.bf16.mxu0 0
        %1984 = vmatpush2.bf16.msra.mxu0 0
        %1985 = vmatprep.subr.bf16.mxu0 0
        %1986 = vmatpush2.bf16.msra.mxu0 0
        %1987 = vmatprep.subr.bf16.mxu0 0
        %1988 = vmatpush2.bf16.msra.mxu0 0
        %1989 = vmatprep.subr.bf16.mxu0 0
        %1990 = vmatpush2.bf16.msra.mxu0 0
        %1991 = vmatprep.subr.bf16.mxu0 0
        %1992 = vmatpush2.bf16.msra.mxu0 0
        %1993 = vmatprep.mubr.bf16.mxu0 0
        %1994 = vmatmul.mubr.bf16.gmra.mxu0 %v1956
        %v1995 = vpop.f32.mrf.mxu0
        %v1996 = vadd.f32 0.0, %v1995
        %v1997 = vpop.f32.mrf.mxu0
        %v1998 = vpop.f32.mrf.mxu0
        %v1999 = vpop.f32.mrf.mxu0
        %2000 = vdwg.mxu0
        %v2002 = vsel %vm1673, %v1767, 0
        %v2005 = vsel %vm1773, %v1278, 0
        %2007 = vmatprep.subr.bf16.mxu0 0
        %2008 = vmatpush1.bf16.msra.mxu0 0
        %2009 = vmatprep.subr.bf16.mxu0 0
        %2010 = vmatpush1.bf16.msra.mxu0 0
        %2011 = vmatprep.subr.bf16.mxu0 0
        %2012 = vmatpush1.bf16.msra.mxu0 0
        %2013 = vmatprep.subr.bf16.mxu0 0
        %2014 = vmatpush1.bf16.msra.mxu0 0
        %2015 = vmatprep.subr.bf16.mxu0 0
        %2016 = vmatpush1.bf16.msra.mxu0 0
        %2017 = vmatprep.subr.bf16.mxu0 0
        %2018 = vmatpush1.bf16.msra.mxu0 0
        %2019 = vmatprep.subr.bf16.mxu0 0
        %2020 = vmatpush1.bf16.msra.mxu0 0
        %2021 = vmatprep.subr.bf16.mxu0 0
        %2022 = vmatpush1.bf16.msra.mxu0 %v2005
        %2023 = vmatprep.subr.bf16.mxu0 0
        %2024 = vmatpush2.bf16.msra.mxu0 0
        %2025 = vmatprep.subr.bf16.mxu0 0
        %2026 = vmatpush2.bf16.msra.mxu0 0
        %2027 = vmatprep.subr.bf16.mxu0 0
        %2028 = vmatpush2.bf16.msra.mxu0 0
        %2029 = vmatprep.subr.bf16.mxu0 0
        %2030 = vmatpush2.bf16.msra.mxu0 0
        %2031 = vmatprep.subr.bf16.mxu0 0
        %2032 = vmatpush2.bf16.msra.mxu0 0
        %2033 = vmatprep.subr.bf16.mxu0 0
        %2034 = vmatpush2.bf16.msra.mxu0 0
        %2035 = vmatprep.subr.bf16.mxu0 0
        %2036 = vmatpush2.bf16.msra.mxu0 0
        %2037 = vmatprep.subr.bf16.mxu0 0
        %2038 = vmatpush2.bf16.msra.mxu0 0
        %2039 = vmatprep.mubr.bf16.mxu0 0
        %2040 = vmatmul.mubr.bf16.gmra.mxu0 %v2002
        %v2041 = vpop.f32.mrf.mxu0
        %v2042 = vadd.f32 0.0, %v2041
        %v2043 = vpop.f32.mrf.mxu0
        %v2044 = vpop.f32.mrf.mxu0
        %v2045 = vpop.f32.mrf.mxu0
        %2046 = vdwg.mxu0
        %v2048 = vsel %vm1673, %v1768, 0
        %v2051 = vsel %vm1773, %v1279, 0
        %2053 = vmatprep.subr.bf16.mxu0 0
        %2054 = vmatpush1.bf16.msra.mxu0 0
        %2055 = vmatprep.subr.bf16.mxu0 0
        %2056 = vmatpush1.bf16.msra.mxu0 0
        %2057 = vmatprep.subr.bf16.mxu0 0
        %2058 = vmatpush1.bf16.msra.mxu0 0
        %2059 = vmatprep.subr.bf16.mxu0 0
        %2060 = vmatpush1.bf16.msra.mxu0 0
        %2061 = vmatprep.subr.bf16.mxu0 0
        %2062 = vmatpush1.bf16.msra.mxu0 0
        %2063 = vmatprep.subr.bf16.mxu0 0
        %2064 = vmatpush1.bf16.msra.mxu0 0
        %2065 = vmatprep.subr.bf16.mxu0 0
        %2066 = vmatpush1.bf16.msra.mxu0 0
        %2067 = vmatprep.subr.bf16.mxu0 0
        %2068 = vmatpush1.bf16.msra.mxu0 %v2051
        %2069 = vmatprep.subr.bf16.mxu0 0
        %2070 = vmatpush2.bf16.msra.mxu0 0
        %2071 = vmatprep.subr.bf16.mxu0 0
        %2072 = vmatpush2.bf16.msra.mxu0 0
        %2073 = vmatprep.subr.bf16.mxu0 0
        %2074 = vmatpush2.bf16.msra.mxu0 0
        %2075 = vmatprep.subr.bf16.mxu0 0
        %2076 = vmatpush2.bf16.msra.mxu0 0
        %2077 = vmatprep.subr.bf16.mxu0 0
        %2078 = vmatpush2.bf16.msra.mxu0 0
        %2079 = vmatprep.subr.bf16.mxu0 0
        %2080 = vmatpush2.bf16.msra.mxu0 0
        %2081 = vmatprep.subr.bf16.mxu0 0
        %2082 = vmatpush2.bf16.msra.mxu0 0
        %2083 = vmatprep.subr.bf16.mxu0 0
        %2084 = vmatpush2.bf16.msra.mxu0 0
        %2085 = vmatprep.mubr.bf16.mxu0 0
        %2086 = vmatmul.mubr.bf16.gmra.mxu0 %v2048
        %v2087 = vpop.f32.mrf.mxu0
        %v2088 = vadd.f32 0.0, %v2087
        %v2089 = vpop.f32.mrf.mxu0
        %v2090 = vpop.f32.mrf.mxu0
        %v2091 = vpop.f32.mrf.mxu0
        %2092 = vdwg.mxu0
        %v2094 = vsel %vm1673, %v1769, 0
        %v2097 = vsel %vm1773, %v1280, 0
        %2099 = vmatprep.subr.bf16.mxu0 0
        %2100 = vmatpush1.bf16.msra.mxu0 0
        %2101 = vmatprep.subr.bf16.mxu0 0
        %2102 = vmatpush1.bf16.msra.mxu0 0
        %2103 = vmatprep.subr.bf16.mxu0 0
        %2104 = vmatpush1.bf16.msra.mxu0 0
        %2105 = vmatprep.subr.bf16.mxu0 0
        %2106 = vmatpush1.bf16.msra.mxu0 0
        %2107 = vmatprep.subr.bf16.mxu0 0
        %2108 = vmatpush1.bf16.msra.mxu0 0
        %2109 = vmatprep.subr.bf16.mxu0 0
        %2110 = vmatpush1.bf16.msra.mxu0 0
        %2111 = vmatprep.subr.bf16.mxu0 0
        %2112 = vmatpush1.bf16.msra.mxu0 0
        %2113 = vmatprep.subr.bf16.mxu0 0
        %2114 = vmatpush1.bf16.msra.mxu0 %v2097
        %2115 = vmatprep.subr.bf16.mxu0 0
        %2116 = vmatpush2.bf16.msra.mxu0 0
        %2117 = vmatprep.subr.bf16.mxu0 0
        %2118 = vmatpush2.bf16.msra.mxu0 0
        %2119 = vmatprep.subr.bf16.mxu0 0
        %2120 = vmatpush2.bf16.msra.mxu0 0
        %2121 = vmatprep.subr.bf16.mxu0 0
        %2122 = vmatpush2.bf16.msra.mxu0 0
        %2123 = vmatprep.subr.bf16.mxu0 0
        %2124 = vmatpush2.bf16.msra.mxu0 0
        %2125 = vmatprep.subr.bf16.mxu0 0
        %2126 = vmatpush2.bf16.msra.mxu0 0
        %2127 = vmatprep.subr.bf16.mxu0 0
        %2128 = vmatpush2.bf16.msra.mxu0 0
        %2129 = vmatprep.subr.bf16.mxu0 0
        %2130 = vmatpush2.bf16.msra.mxu0 0
        %2131 = vmatprep.mubr.bf16.mxu0 0
        %2132 = vmatmul.mubr.bf16.gmra.mxu0 %v2094
        %v2133 = vpop.f32.mrf.mxu0
        %v2134 = vadd.f32 0.0, %v2133
        %v2135 = vpop.f32.mrf.mxu0
        %v2136 = vpop.f32.mrf.mxu0
        %v2137 = vpop.f32.mrf.mxu0
        %2138 = vdwg.mxu0
        %v2139 = vpack.c.bf16 %v1812, %v1812
        %v2140 = vpack.c.bf16 %v1858, %v1858
        %v2141 = vpack.c.bf16 %v1904, %v1904
        %v2142 = vpack.c.bf16 %v1950, %v1950
        %v2143 = vpack.c.bf16 %v1996, %v1996
        %v2144 = vpack.c.bf16 %v2042, %v2042
        %v2145 = vpack.c.bf16 %v2088, %v2088
        %v2146 = vpack.c.bf16 %v2134, %v2134
        %v2147 = vld [vmem:[%s6] sm:$0xf]
        %v2148 = vld [vmem:[%s6 + $0x4] sm:$0xf]
        %v2149 = vld [vmem:[%s6 + $0x8] sm:$0xf]
        %v2150 = vld [vmem:[%s6 + $0xc] sm:$0xf]
        %s2151 = scalar_lea.vmem %s6, 16
        %v2152 = vld [vmem:[%s2151] sm:$0xf]
        %v2153 = vld [vmem:[%s2151 + $0x4] sm:$0xf]
        %v2154 = vld [vmem:[%s2151 + $0x8] sm:$0xf]
        %v2155 = vld [vmem:[%s2151 + $0xc] sm:$0xf]
        %v2158 = vunpack.c.l.b16 %v2141
        %v2159 = vunpack.c.l.b16 %v2142
        %v2160 = vpack.c.b16 %v2159, %v2158
        %v2165 = vunpack.c.l.b16 %v2152
        %v2166 = vunpack.c.l.b16 %v2153
        %v2167 = vunpack.c.l.b16 %v2154
        %v2168 = vunpack.c.l.b16 %v2155
        %v2169 = vpack.c.b16 %v2166, %v2165
        %v2170 = vpack.c.b16 %v2168, %v2167
        %v2174 = vsel %vm1281, %v2160, 0
        %2176 = vmatprep.subr.bf16.mxu0 0
        %2177 = vmatpush1.bf16.msra.mxu0 0
        %2178 = vmatprep.subr.bf16.mxu0 0
        %2179 = vmatpush1.bf16.msra.mxu0 0
        %2180 = vmatprep.subr.bf16.mxu0 0
        %2181 = vmatpush1.bf16.msra.mxu0 0
        %2182 = vmatprep.subr.bf16.mxu0 0
        %2183 = vmatpush1.bf16.msra.mxu0 0
        %2184 = vmatprep.subr.bf16.mxu0 0
        %2185 = vmatpush1.bf16.msra.mxu0 0
        %2186 = vmatprep.subr.bf16.mxu0 0
        %2187 = vmatpush1.bf16.msra.mxu0 0
        %2188 = vmatprep.subr.bf16.mxu0 0
        %2189 = vmatpush1.bf16.msra.mxu0 %v2170
        %2190 = vmatprep.subr.bf16.mxu0 0
        %2191 = vmatpush1.bf16.msra.mxu0 %v2169
        %2192 = vmatprep.subr.bf16.mxu0 0
        %2193 = vmatpush2.bf16.msra.mxu0 0
        %2194 = vmatprep.subr.bf16.mxu0 0
        %2195 = vmatpush2.bf16.msra.mxu0 0
        %2196 = vmatprep.subr.bf16.mxu0 0
        %2197 = vmatpush2.bf16.msra.mxu0 0
        %2198 = vmatprep.subr.bf16.mxu0 0
        %2199 = vmatpush2.bf16.msra.mxu0 0
        %2200 = vmatprep.subr.bf16.mxu0 0
        %2201 = vmatpush2.bf16.msra.mxu0 0
        %2202 = vmatprep.subr.bf16.mxu0 0
        %2203 = vmatpush2.bf16.msra.mxu0 0
        %2204 = vmatprep.subr.bf16.mxu0 0
        %2205 = vmatpush2.bf16.msra.mxu0 0
        %2206 = vmatprep.subr.bf16.mxu0 0
        %2207 = vmatpush2.bf16.msra.mxu0 0
        %2208 = vmatprep.mubr.bf16.mxu0 0
        %2209 = vmatmul.mubr.bf16.gmra.mxu0 %v2174
        %v2210 = vpop.f32.mrf.mxu0
        %v2211 = vadd.f32 0.0, %v2210
        %v2212 = vpop.f32.mrf.mxu0
        %v2213 = vpop.f32.mrf.mxu0
        %v2214 = vadd.f32 0.0, %v2213
        %v2215 = vpop.f32.mrf.mxu0
        %2216 = vdwg.mxu0
        %v2219 = vunpack.c.l.b16 %v2139
        %v2220 = vunpack.c.l.b16 %v2140
        %v2221 = vpack.c.b16 %v2220, %v2219
        %v2226 = vunpack.c.l.b16 %v2147
        %v2227 = vunpack.c.l.b16 %v2148
        %v2228 = vunpack.c.l.b16 %v2149
        %v2229 = vunpack.c.l.b16 %v2150
        %v2230 = vpack.c.b16 %v2227, %v2226
        %v2231 = vpack.c.b16 %v2229, %v2228
        %v2235 = vsel %vm1281, %v2221, 0
        %2237 = vmatprep.subr.bf16.mxu0 0
        %2238 = vmatpush1.bf16.msra.mxu0 0
        %2239 = vmatprep.subr.bf16.mxu0 0
        %2240 = vmatpush1.bf16.msra.mxu0 0
        %2241 = vmatprep.subr.bf16.mxu0 0
        %2242 = vmatpush1.bf16.msra.mxu0 0
        %2243 = vmatprep.subr.bf16.mxu0 0
        %2244 = vmatpush1.bf16.msra.mxu0 0
        %2245 = vmatprep.subr.bf16.mxu0 0
        %2246 = vmatpush1.bf16.msra.mxu0 0
        %2247 = vmatprep.subr.bf16.mxu0 0
        %2248 = vmatpush1.bf16.msra.mxu0 0
        %2249 = vmatprep.subr.bf16.mxu0 0
        %2250 = vmatpush1.bf16.msra.mxu0 %v2231
        %2251 = vmatprep.subr.bf16.mxu0 0
        %2252 = vmatpush1.bf16.msra.mxu0 %v2230
        %2253 = vmatprep.subr.bf16.mxu0 0
        %2254 = vmatpush2.bf16.msra.mxu0 0
        %2255 = vmatprep.subr.bf16.mxu0 0
        %2256 = vmatpush2.bf16.msra.mxu0 0
        %2257 = vmatprep.subr.bf16.mxu0 0
        %2258 = vmatpush2.bf16.msra.mxu0 0
        %2259 = vmatprep.subr.bf16.mxu0 0
        %2260 = vmatpush2.bf16.msra.mxu0 0
        %2261 = vmatprep.subr.bf16.mxu0 0
        %2262 = vmatpush2.bf16.msra.mxu0 0
        %2263 = vmatprep.subr.bf16.mxu0 0
        %2264 = vmatpush2.bf16.msra.mxu0 0
        %2265 = vmatprep.subr.bf16.mxu0 0
        %2266 = vmatpush2.bf16.msra.mxu0 0
        %2267 = vmatprep.subr.bf16.mxu0 0
        %2268 = vmatpush2.bf16.msra.mxu0 0
        %2269 = vmatprep.mubr.bf16.mxu0 0
        %2270 = vmatmul.mubr.bf16.gmra.mxu0 %v2235
        %v2271 = vpop.f32.mrf.mxu0
        %v2272 = vadd.f32 %v2211, %v2271
        %v2273 = vpop.f32.mrf.mxu0
        %v2274 = vpop.f32.mrf.mxu0
        %v2275 = vadd.f32 %v2214, %v2274
        %v2276 = vpop.f32.mrf.mxu0
        %2277 = vdwg.mxu0
        %s2278 = scalar_lea.vmem %s6, 32
        %v2279 = vld [vmem:[%s2278] sm:$0xf]
        %v2280 = vld [vmem:[%s2278 + $0x4] sm:$0xf]
        %v2281 = vld [vmem:[%s2278 + $0x8] sm:$0xf]
        %v2282 = vld [vmem:[%s2278 + $0xc] sm:$0xf]
        %v2285 = vunpack.c.l.b16 %v2143
        %v2286 = vunpack.c.l.b16 %v2144
        %v2287 = vpack.c.b16 %v2286, %v2285
        %v2292 = vunpack.c.l.b16 %v2279
        %v2293 = vunpack.c.l.b16 %v2280
        %v2294 = vunpack.c.l.b16 %v2281
        %v2295 = vunpack.c.l.b16 %v2282
        %v2296 = vpack.c.b16 %v2293, %v2292
        %v2297 = vpack.c.b16 %v2295, %v2294
        %v2301 = vsel %vm1281, %v2287, 0
        %2303 = vmatprep.subr.bf16.mxu0 0
        %2304 = vmatpush1.bf16.msra.mxu0 0
        %2305 = vmatprep.subr.bf16.mxu0 0
        %2306 = vmatpush1.bf16.msra.mxu0 0
        %2307 = vmatprep.subr.bf16.mxu0 0
        %2308 = vmatpush1.bf16.msra.mxu0 0
        %2309 = vmatprep.subr.bf16.mxu0 0
        %2310 = vmatpush1.bf16.msra.mxu0 0
        %2311 = vmatprep.subr.bf16.mxu0 0
        %2312 = vmatpush1.bf16.msra.mxu0 0
        %2313 = vmatprep.subr.bf16.mxu0 0
        %2314 = vmatpush1.bf16.msra.mxu0 0
        %2315 = vmatprep.subr.bf16.mxu0 0
        %2316 = vmatpush1.bf16.msra.mxu0 %v2297
        %2317 = vmatprep.subr.bf16.mxu0 0
        %2318 = vmatpush1.bf16.msra.mxu0 %v2296
        %2319 = vmatprep.subr.bf16.mxu0 0
        %2320 = vmatpush2.bf16.msra.mxu0 0
        %2321 = vmatprep.subr.bf16.mxu0 0
        %2322 = vmatpush2.bf16.msra.mxu0 0
        %2323 = vmatprep.subr.bf16.mxu0 0
        %2324 = vmatpush2.bf16.msra.mxu0 0
        %2325 = vmatprep.subr.bf16.mxu0 0
        %2326 = vmatpush2.bf16.msra.mxu0 0
        %2327 = vmatprep.subr.bf16.mxu0 0
        %2328 = vmatpush2.bf16.msra.mxu0 0
        %2329 = vmatprep.subr.bf16.mxu0 0
        %2330 = vmatpush2.bf16.msra.mxu0 0
        %2331 = vmatprep.subr.bf16.mxu0 0
        %2332 = vmatpush2.bf16.msra.mxu0 0
        %2333 = vmatprep.subr.bf16.mxu0 0
        %2334 = vmatpush2.bf16.msra.mxu0 0
        %2335 = vmatprep.mubr.bf16.mxu0 0
        %2336 = vmatmul.mubr.bf16.gmra.mxu0 %v2301
        %v2337 = vpop.f32.mrf.mxu0
        %v2338 = vadd.f32 0.0, %v2337
        %v2339 = vpop.f32.mrf.mxu0
        %v2340 = vpop.f32.mrf.mxu0
        %v2341 = vadd.f32 0.0, %v2340
        %v2342 = vpop.f32.mrf.mxu0
        %2343 = vdwg.mxu0
        %v2344 = vadd.f32 %v2272, %v2338
        %v2345 = vadd.f32 %v2275, %v2341
        %s2346 = scalar_lea.vmem %s6, 48
        %v2347 = vld [vmem:[%s2346] sm:$0xf]
        %v2348 = vld [vmem:[%s2346 + $0x4] sm:$0xf]
        %v2349 = vld [vmem:[%s2346 + $0x8] sm:$0xf]
        %v2350 = vld [vmem:[%s2346 + $0xc] sm:$0xf]
        %v2353 = vunpack.c.l.b16 %v2145
        %v2354 = vunpack.c.l.b16 %v2146
        %v2355 = vpack.c.b16 %v2354, %v2353
        %v2360 = vunpack.c.l.b16 %v2347
        %v2361 = vunpack.c.l.b16 %v2348
        %v2362 = vunpack.c.l.b16 %v2349
        %v2363 = vunpack.c.l.b16 %v2350
        %v2364 = vpack.c.b16 %v2361, %v2360
        %v2365 = vpack.c.b16 %v2363, %v2362
        %v2369 = vsel %vm1281, %v2355, 0
        %2371 = vmatprep.subr.bf16.mxu0 0
        %2372 = vmatpush1.bf16.msra.mxu0 0
        %2373 = vmatprep.subr.bf16.mxu0 0
        %2374 = vmatpush1.bf16.msra.mxu0 0
        %2375 = vmatprep.subr.bf16.mxu0 0
        %2376 = vmatpush1.bf16.msra.mxu0 0
        %2377 = vmatprep.subr.bf16.mxu0 0
        %2378 = vmatpush1.bf16.msra.mxu0 0
        %2379 = vmatprep.subr.bf16.mxu0 0
        %2380 = vmatpush1.bf16.msra.mxu0 0
        %2381 = vmatprep.subr.bf16.mxu0 0
        %2382 = vmatpush1.bf16.msra.mxu0 0
        %2383 = vmatprep.subr.bf16.mxu0 0
        %2384 = vmatpush1.bf16.msra.mxu0 %v2365
        %2385 = vmatprep.subr.bf16.mxu0 0
        %2386 = vmatpush1.bf16.msra.mxu0 %v2364
        %2387 = vmatprep.subr.bf16.mxu0 0
        %2388 = vmatpush2.bf16.msra.mxu0 0
        %2389 = vmatprep.subr.bf16.mxu0 0
        %2390 = vmatpush2.bf16.msra.mxu0 0
        %2391 = vmatprep.subr.bf16.mxu0 0
        %2392 = vmatpush2.bf16.msra.mxu0 0
        %2393 = vmatprep.subr.bf16.mxu0 0
        %2394 = vmatpush2.bf16.msra.mxu0 0
        %2395 = vmatprep.subr.bf16.mxu0 0
        %2396 = vmatpush2.bf16.msra.mxu0 0
        %2397 = vmatprep.subr.bf16.mxu0 0
        %2398 = vmatpush2.bf16.msra.mxu0 0
        %2399 = vmatprep.subr.bf16.mxu0 0
        %2400 = vmatpush2.bf16.msra.mxu0 0
        %2401 = vmatprep.subr.bf16.mxu0 0
        %2402 = vmatpush2.bf16.msra.mxu0 0
        %2403 = vmatprep.mubr.bf16.mxu0 0
        %2404 = vmatmul.mubr.bf16.gmra.mxu0 %v2369
        %v2405 = vpop.f32.mrf.mxu0
        %v2406 = vadd.f32 0.0, %v2405
        %v2407 = vpop.f32.mrf.mxu0
        %v2408 = vpop.f32.mrf.mxu0
        %v2409 = vadd.f32 0.0, %v2408
        %v2410 = vpop.f32.mrf.mxu0
        %2411 = vdwg.mxu0
        %v2412 = vadd.f32 %v2344, %v2406
        %v2413 = vadd.f32 %v2345, %v2409
        %2414 = vst.msk [vmem:[%s272] sm:$0xff] %vm283, %v2412
        %2415 = vst.msk [vmem:[%s272 + $0x8] sm:$0xff] %vm283, %v2413
        %s2416 = sand.u32 %s181, 1
        %s2417 = scalar_lea.sflag [#allocation3], %s2416
        %s2418 = sand.u32 %s181, 1
        %s2419 = smul.addr %s2418, 16
        %s2420 = scalar_lea.vmem [#allocation2], %s2419
        // Predicated region
        $region49: #{tpu_custom_call.1} parent=47 // pred_check
          %p2421 = pneg %p191
        $region50: #{tpu_custom_call.1} parent=47 // pred_check_branch
          %2423 = sbr.rel (%p2421) target = $region52
        $region51: #{tpu_custom_call.1} parent=47 // pred_region
          %s2424 = smul.u32 2, %s21
          %s2426 = ssub.s32 256, 256
          %2427 = vsyncadd %s2417, %s2426
          %s2428 = smul.addr %s2424, 128
          %s2429 = scalar_lea.hbm %s7, %s2428
          %s2430 = sshll.u32 %s2420, 4
          %s2431 = int_to_ptr.vmem [resolvable:$true] %s2430
          %2436 = dma.vmem_to_hbm [thread:$0]  %s2431, 256, %s2429, %s2417, 128, 128, 8
        $region52: #{tpu_custom_call.1} parent=47 // pred_fallthru
          _
      $region48: #{tpu_custom_call.1} parent=5 // pred_fallthru
        _
      %p2437 = scmp.le.s32.totalorder 2, %s16
      // Predicated region
      $region53: #{tpu_custom_call.1} parent=5 // pred_check
        %p2438 = pneg %p2437
      $region54: #{tpu_custom_call.1} parent=5 // pred_check_branch
        %2440 = sbr.rel (%p2438) target = $region56
      $region55: #{tpu_custom_call.1} parent=5 // pred_region
        %s2441 = ssub.s32 %s16, 2
        // Predicated region
        $region57: #{tpu_custom_call.1} parent=55 // pred_check
          %p2442 = pneg %p197
        $region58: #{tpu_custom_call.1} parent=55 // pred_check_branch
          %2444 = sbr.rel (%p2442) target = $region60
        $region59: #{tpu_custom_call.1} parent=55 // pred_region
          %s2445 = sand.u32 %s182, 1
          %s2446 = scalar_lea.sflag [#allocation3], %s2445
          %s2447 = sand.u32 %s182, 1
          %s2448 = smul.addr %s2447, 16
          %s2449 = scalar_lea.vmem [#allocation2], %s2448
          %2450 = dma.done %s2446, 256
        $region60: #{tpu_custom_call.1} parent=55 // pred_fallthru
          _
      $region56: #{tpu_custom_call.1} parent=5 // pred_fallthru
        _
    $region6: #{tpu_custom_call.1} parent=1 // loop_footer
      %s20 = sadd.s32 1, %s16
    $region7: #{tpu_custom_call.1} parent=1 // loop_footer_branch
      %15 = sbr.rel target = $region3
    $region8: #{tpu_custom_call.1} parent=1 // loop_exit
      _
    %2451 = vsyncpa [#allocation3], 1
    %s2452 = scalar_lea.sflag [#allocation3], 1
    %2453 = vsyncpa %s2452, 1

</llo_original>
